<compile_context>
chip_gen: v5e
topology: v5e:2x2
jax: 0.10.0
libtpu: 0.0.40
codegen_flags: <defaults>
</compile_context>

<pallas_src>
import functools

import jax
import jax.numpy as jnp
from jax import lax
from jax.experimental import pallas as pl
from jax.experimental.pallas import tpu as pltpu

LANE = 128
MXU_DTYPE = jnp.bfloat16   # MXU-path dtype (f32 accumulation inside the kernel)


def _round_up(n, m):
    return ((n + m - 1) // m) * m


def _const_spec(shape):
    nz = len(shape)
    return pl.BlockSpec(shape, lambda *_: (0,) * nz)


# ------------------------------- Pallas kernel ------------------------------ #

def _hotr_head_kernel(hs_ref, ihs_ref, instblk_ref,
                      wc_ref, bc_ref,
                      wb1_ref, bb1_ref, wb2_ref, bb2_ref, wb3_ref, bb3_ref,
                      wp1_ref, bp1_ref, wp2_ref, bp2_ref, wp3_ref, bp3_ref,
                      wa_ref, ba_ref,
                      det_ref, int_ref, *, hidden, n_cls, inv_tau):
    f32 = jnp.float32

    # ---- DETR detection heads: class linear + bbox MLP3(+sigmoid), packed ----
    xd = hs_ref[0]                                            # (L*Nd, H) bf16
    cls = jnp.dot(xd, wc_ref[...], preferred_element_type=f32) + bc_ref[...]
    h = jnp.maximum(jnp.dot(xd, wb1_ref[...], preferred_element_type=f32)
                    + bb1_ref[...], 0.0).astype(xd.dtype)
    h = jnp.maximum(jnp.dot(h, wb2_ref[...], preferred_element_type=f32)
                    + bb2_ref[...], 0.0).astype(xd.dtype)
    box = jnp.dot(h, wb3_ref[...], preferred_element_type=f32) + bb3_ref[...]
    lane_d = lax.broadcasted_iota(jnp.int32, cls.shape, 1)
    box_cols = (lane_d >= n_cls) & (lane_d < n_cls + 4)
    det_ref[0] = jnp.where(box_cols, jax.nn.sigmoid(box), cls).astype(det_ref.dtype)

    # ---- interaction head: action linear + fused H/O pointer MLP3 + bmms ----
    x = ihs_ref[0]                                            # (L*Nq, H) bf16
    act = jnp.dot(x, wa_ref[...], preferred_element_type=f32) + ba_ref[...]

    p = jnp.maximum(jnp.dot(x, wp1_ref[...], preferred_element_type=f32)
                    + bp1_ref[...], 0.0).astype(x.dtype)
    p = jnp.maximum(jnp.dot(p, wp2_ref[...], preferred_element_type=f32)
                    + bp2_ref[...], 0.0).astype(x.dtype)
    p = jnp.dot(p, wp3_ref[...], preferred_element_type=f32) + bp3_ref[...]  # (M, 2H)

    # per-half l2norm (cols [0:H] = H-pointer, [H:2H] = O-pointer); rsqrt -> EUP.
    # F.normalize semantics: x / max(||x||, 1e-12) == x * rsqrt(max(ssq, 1e-24)).
    lane_p = lax.broadcasted_iota(jnp.int32, p.shape, 1)
    is_h = lane_p < hidden
    pp = p * p
    ssq_h = jnp.sum(jnp.where(is_h, pp, 0.0), axis=-1, keepdims=True)
    ssq_o = jnp.sum(jnp.where(is_h, 0.0, pp), axis=-1, keepdims=True)
    scale = jnp.where(is_h, lax.rsqrt(jnp.maximum(ssq_h, 1e-24)),
                      lax.rsqrt(jnp.maximum(ssq_o, 1e-24)))
    p_n = (p * scale).astype(x.dtype)                         # bf16 for the bmm

    # inst_repr rows live block-diagonally in instblk (all other rows are zero);
    # a row-wise l2norm over 2H equals F.normalize over H of the nonzero half,
    # and zero rows stay exactly zero (rsqrt(1e-24) * 0 == 0).
    ib = instblk_ref[0].astype(f32)                           # (W_int, 2H)
    inst_n = (ib * lax.rsqrt(
        jnp.maximum(jnp.sum(ib * ib, axis=-1, keepdims=True), 1e-24))
              ).astype(x.dtype)

    # One dot covers BOTH pointer bmms (transposed-RHS contraction, MXU-native):
    # columns [n_act : n_act+Nd] = hidx, [n_act+Nd : n_act+2Nd] = oidx; every
    # other column is zero and just adds onto the zero-padded action logits.
    idx = lax.dot_general(p_n, inst_n, (((1,), (1,)), ((), ())),
                          preferred_element_type=f32)
    int_ref[0] = (act + idx * inv_tau).astype(int_ref.dtype)


# --------------------------------- wrapper ---------------------------------- #

def hotr_head(hs_rows, ihs_rows, inst_blk, kp, *, hidden, n_cls, tau):
    """One fused pallas_call, gridded over B ("parallel" -> 2-TC on v7x).
    hs_rows (B, L*Nd, H) bf16; ihs_rows (B, L*Nq, H) bf16; inst_blk
    (B, W_int, 2H) f32. Returns (B, L*Nd, W_det) and (B, L*Nq, W_int) f32."""
    B, md, H = hs_rows.shape
    _, mq, _ = ihs_rows.shape
    _, w_int, _ = inst_blk.shape
    w_det = kp["wc"].shape[1]

    data_specs = [
        pl.BlockSpec((1, md, H), lambda b: (b, 0, 0)),
        pl.BlockSpec((1, mq, H), lambda b: (b, 0, 0)),
        pl.BlockSpec((1, w_int, 2 * H), lambda b: (b, 0, 0)),
    ]
    worder = ("wc", "bc", "wb1", "bb1", "wb2", "bb2", "wb3", "bb3",
              "wp1", "bp1", "wp2", "bp2", "wp3", "bp3", "wa", "ba")
    weights = [kp[k] for k in worder]
    # NOTE: at production sizes (H=256, L=6), process >=2 batch elements per
    # grid step (block (Bblk, L*Nq, H)) to fill the 256-row MXU dimension, and
    # consider pipeline_mode=pl.Buffered(1) on the grid-invariant weight specs
    # for v7x's smaller VMEM. Unnecessary at these toy sizes.
    return pl.pallas_call(
        functools.partial(_hotr_head_kernel, hidden=hidden, n_cls=n_cls,
                          inv_tau=1.0 / tau),
        grid=(B,),
        in_specs=data_specs + [_const_spec(w.shape) for w in weights],
        out_specs=[pl.BlockSpec((1, md, w_det), lambda b: (b, 0, 0)),
                   pl.BlockSpec((1, mq, w_int), lambda b: (b, 0, 0))],
        out_shape=[jax.ShapeDtypeStruct((B, md, w_det), jnp.float32),
                   jax.ShapeDtypeStruct((B, mq, w_int), jnp.float32)],
        compiler_params=pltpu.CompilerParams(
            dimension_semantics=("parallel",)),
    )(hs_rows, ihs_rows, inst_blk, *weights)


# --------------------------- parameter construction ------------------------- #

def init_linear(key, fan_in, fan_out):
    k1, k2 = jax.random.split(key)
    bound = 1.0 / (fan_in ** 0.5)
    w = jax.random.uniform(k1, (fan_in, fan_out), jnp.float32, -bound, bound)
    b = jax.random.uniform(k2, (fan_out,), jnp.float32, -bound, bound)
    return w, b


def init_mlp3(key, hidden, out_dim):
    k1, k2, k3 = jax.random.split(key, 3)
    return (init_linear(k1, hidden, hidden),
            init_linear(k2, hidden, hidden),
            init_linear(k3, hidden, out_dim))


def init_hotr_params(key, hidden, num_actions, num_classes):
    keys = jax.random.split(key, 5)
    return {
        "H_Pointer_embed": init_mlp3(keys[0], hidden, hidden),
        "O_Pointer_embed": init_mlp3(keys[1], hidden, hidden),
        "action_embed": init_linear(keys[2], hidden, num_actions + 1),
        # DETR heads used inside HOTR.forward:
        "class_embed": init_linear(keys[3], hidden, num_classes + 1),
        "bbox_embed": init_mlp3(keys[4], hidden, 4),
        "meta": {"num_actions": num_actions, "num_classes": num_classes,
                 "hidden": hidden},
    }


def _pack_kernel_params(params, n_cls, n_act, w_det, w_int):
    """Wrapper-side (free) weight packing: lane-padded class/box/action heads,
    concatenated layer-1 and block-diagonal layer-2/3 H/O pointer weights."""
    H = params["meta"]["hidden"]
    bf = MXU_DTYPE

    def pad_cols(w, b, width, offset=0):
        wp = jnp.zeros((w.shape[0], width), jnp.float32)
        wp = wp.at[:, offset:offset + w.shape[1]].set(w)
        bp = jnp.zeros((1, width), jnp.float32)
        bp = bp.at[:, offset:offset + b.shape[0]].set(b)
        return wp.astype(bf), bp

    def blockdiag(a, b):
        m = jnp.zeros((2 * H, 2 * H), jnp.float32)
        m = m.at[:H, :H].set(a).at[H:, H:].set(b)
        return m.astype(bf)

    def cat_bias(a, b):
        return jnp.concatenate([a, b])[None, :]       # (1, 2H) f32

    wc, bc = params["class_embed"]
    (wb1, bb1), (wb2, bb2), (wb3, bb3) = params["bbox_embed"]
    (wh1, bh1), (wh2, bh2), (wh3, bh3) = params["H_Pointer_embed"]
    (wo1, bo1), (wo2, bo2), (wo3, bo3) = params["O_Pointer_embed"]
    wa, ba = params["action_embed"]

    kp = {}
    kp["wc"], kp["bc"] = pad_cols(wc, bc, w_det)                       # cols [0:n_cls]
    kp["wb1"], kp["bb1"] = wb1.astype(bf), bb1[None, :]
    kp["wb2"], kp["bb2"] = wb2.astype(bf), bb2[None, :]
    kp["wb3"], kp["bb3"] = pad_cols(wb3, bb3, w_det, offset=n_cls)     # cols [n_cls:n_cls+4]
    kp["wp1"] = jnp.concatenate([wh1, wo1], axis=1).astype(bf)         # (H, 2H)
    kp["bp1"] = cat_bias(bh1, bo1)
    kp["wp2"], kp["bp2"] = blockdiag(wh2, wo2), cat_bias(bh2, bo2)     # (2H, 2H)
    kp["wp3"], kp["bp3"] = blockdiag(wh3, wo3), cat_bias(bh3, bo3)
    kp["wa"], kp["ba"] = pad_cols(wa, ba, w_int)                       # cols [0:n_act]
    return kp


# ------------------------------ HOTR forward -------------------------------- #

def hotr_forward(hs, interaction_hs, params, tau, hoi_aux_loss=True):
    """hs: (L, B, Nd, H) DETR decoder output; interaction_hs: (L, B, Nq, H)."""
    L, B, Nd, H = hs.shape
    Nq = interaction_hs.shape[2]
    n_cls = params["meta"]["num_classes"] + 1
    n_act = params["meta"]["num_actions"] + 1
    w_det = _round_up(n_cls + 4, LANE)
    w_int = _round_up(n_act + 2 * Nd, LANE)

    kp = _pack_kernel_params(params, n_cls, n_act, w_det, w_int)

    # Layout plumbing lives in the wrapper (no in-kernel reshapes):
    hs_rows = hs.transpose(1, 0, 2, 3).reshape(B, L * Nd, H).astype(MXU_DTYPE)
    ihs_rows = interaction_hs.transpose(1, 0, 2, 3).reshape(B, L * Nq, H).astype(MXU_DTYPE)

    # Block-diagonal inst slab: row n_act+k     = [hs[-1][k], 0]   -> hidx col
    #                           row n_act+Nd+k  = [0, hs[-1][k]]   -> oidx col
    # Kept f32 so inst_repr is normalized from f32 inside the kernel.
    hs_last = hs[-1]                                            # (B, Nd, H)
    inst_blk = jnp.zeros((B, w_int, 2 * H), jnp.float32)
    inst_blk = inst_blk.at[:, n_act:n_act + Nd, :H].set(hs_last)
    inst_blk = inst_blk.at[:, n_act + Nd:n_act + 2 * Nd, H:].set(hs_last)

    det_slab, int_slab = hotr_head(hs_rows, ihs_rows, inst_blk, kp,
                                   hidden=H, n_cls=n_cls, tau=tau)

    det = det_slab.reshape(B, L, Nd, w_det).transpose(1, 0, 2, 3)
    inter = int_slab.reshape(B, L, Nq, w_int).transpose(1, 0, 2, 3)

    outputs_class = det[..., :n_cls]                            # (L,B,Nd,n_cls)
    outputs_coord = det[..., n_cls:n_cls + 4]                   # (L,B,Nd,4)
    outputs_action = inter[..., :n_act]                         # (L,B,Nq,n_act)
    outputs_hidx = inter[..., n_act:n_act + Nd]                 # (L,B,Nq,Nd)
    outputs_oidx = inter[..., n_act + Nd:n_act + 2 * Nd]        # (L,B,Nq,Nd)

    out = {
        "pred_logits": outputs_class[-1],
        "pred_boxes": outputs_coord[-1],
        "pred_hidx": outputs_hidx[-1],
        "pred_oidx": outputs_oidx[-1],
        "pred_actions": outputs_action[-1],
        "hoi_recognition_time": 0.0,  # TODO(synk): host-side timing side channel
    }
    if hoi_aux_loss:
        # _set_aux_loss: last-layer detections repeated, per-layer HOI heads [:-1]
        out["hoi_aux_outputs"] = [
            {"pred_logits": outputs_class[-1],
             "pred_boxes": outputs_coord[-1],
             "pred_hidx": outputs_hidx[l],
             "pred_oidx": outputs_oidx[l],
             "pred_actions": outputs_action[l]}
            for l in range(L - 1)
        ]
    return out


# ---------------------------------- main ------------------------------------ #

if __name__ == "__main__":
    L = 3            # decoder layers
    B = 2            # batch (even -> clean 2-TC split on v7x)
    Nd = 8           # DETR object queries
    Nq = 8           # HOI queries (num_hoi_queries)
    H = 32           # hidden_dim (detr.transformer.d_model)
    NUM_ACTIONS = 6
    NUM_CLASSES = 5
    TAU = 0.05

    key = jax.random.PRNGKey(0)
    k_hs, k_ihs, k_params = jax.random.split(key, 3)

    hs = jax.random.normal(k_hs, (L, B, Nd, H), jnp.float32)
    interaction_hs = jax.random.normal(k_ihs, (L, B, Nq, H), jnp.float32)
    params = init_hotr_params(k_params, H, NUM_ACTIONS, NUM_CLASSES)

    out = hotr_forward(hs, interaction_hs, params, TAU, hoi_aux_loss=True)
    jax.block_until_ready(
        (out["pred_logits"], out["pred_boxes"], out["pred_hidx"],
         out["pred_oidx"], out["pred_actions"]))

    assert out["pred_logits"].shape == (B, Nd, NUM_CLASSES + 1)
    assert out["pred_boxes"].shape == (B, Nd, 4)
    assert out["pred_hidx"].shape == (B, Nq, Nd)
    assert out["pred_oidx"].shape == (B, Nq, Nd)
    assert out["pred_actions"].shape == (B, Nq, NUM_ACTIONS + 1)
    assert len(out["hoi_aux_outputs"]) == L - 1
    for t in (out["pred_logits"], out["pred_boxes"], out["pred_hidx"],
              out["pred_oidx"], out["pred_actions"]):
        assert bool(jnp.all(jnp.isfinite(t)))

    print("KERNEL_OK")
</pallas_src>

<mosaic_0001>
module attributes {stable_mosaic.version = 11 : i64} {
  func.func @_hotr_head_kernel(%arg0: i32, %arg1: memref<1x24x32xbf16, #tpu.memory_space<vmem>>, %arg2: memref<1x24x32xbf16, #tpu.memory_space<vmem>>, %arg3: memref<1x128x64xf32, #tpu.memory_space<vmem>>, %arg4: memref<32x128xbf16, #tpu.memory_space<vmem>>, %arg5: memref<1x128xf32, #tpu.memory_space<vmem>>, %arg6: memref<32x32xbf16, #tpu.memory_space<vmem>>, %arg7: memref<1x32xf32, #tpu.memory_space<vmem>>, %arg8: memref<32x32xbf16, #tpu.memory_space<vmem>>, %arg9: memref<1x32xf32, #tpu.memory_space<vmem>>, %arg10: memref<32x128xbf16, #tpu.memory_space<vmem>>, %arg11: memref<1x128xf32, #tpu.memory_space<vmem>>, %arg12: memref<32x64xbf16, #tpu.memory_space<vmem>>, %arg13: memref<1x64xf32, #tpu.memory_space<vmem>>, %arg14: memref<64x64xbf16, #tpu.memory_space<vmem>>, %arg15: memref<1x64xf32, #tpu.memory_space<vmem>>, %arg16: memref<64x64xbf16, #tpu.memory_space<vmem>>, %arg17: memref<1x64xf32, #tpu.memory_space<vmem>>, %arg18: memref<32x128xbf16, #tpu.memory_space<vmem>>, %arg19: memref<1x128xf32, #tpu.memory_space<vmem>>, %arg20: memref<1x24x128xf32, #tpu.memory_space<vmem>>, %arg21: memref<1x24x128xf32, #tpu.memory_space<vmem>>) attributes {dimension_semantics = [#tpu.dimension_semantics<parallel>], iteration_bounds = array<i64: 2>, scalar_prefetch = 0 : i64, scratch_operands = 0 : i64, tpu.core_type = #tpu.core_type<tc>, window_params = [{transform_indices = @transform_0, window_bounds = array<i64: 1, 24, 32>}, {transform_indices = @transform_1, window_bounds = array<i64: 1, 24, 32>}, {transform_indices = @transform_2, window_bounds = array<i64: 1, 128, 64>}, {pipeline_mode = #tpu.pipeline_mode<synchronous>, transform_indices = @transform_3, window_bounds = array<i64: 32, 128>}, {pipeline_mode = #tpu.pipeline_mode<synchronous>, transform_indices = @transform_4, window_bounds = array<i64: 1, 128>}, {pipeline_mode = #tpu.pipeline_mode<synchronous>, transform_indices = @transform_5, window_bounds = array<i64: 32, 32>}, {pipeline_mode = #tpu.pipeline_mode<synchronous>, transform_indices = @transform_6, window_bounds = array<i64: 1, 32>}, {pipeline_mode = #tpu.pipeline_mode<synchronous>, transform_indices = @transform_7, window_bounds = array<i64: 32, 32>}, {pipeline_mode = #tpu.pipeline_mode<synchronous>, transform_indices = @transform_8, window_bounds = array<i64: 1, 32>}, {pipeline_mode = #tpu.pipeline_mode<synchronous>, transform_indices = @transform_9, window_bounds = array<i64: 32, 128>}, {pipeline_mode = #tpu.pipeline_mode<synchronous>, transform_indices = @transform_10, window_bounds = array<i64: 1, 128>}, {pipeline_mode = #tpu.pipeline_mode<synchronous>, transform_indices = @transform_11, window_bounds = array<i64: 32, 64>}, {pipeline_mode = #tpu.pipeline_mode<synchronous>, transform_indices = @transform_12, window_bounds = array<i64: 1, 64>}, {pipeline_mode = #tpu.pipeline_mode<synchronous>, transform_indices = @transform_13, window_bounds = array<i64: 64, 64>}, {pipeline_mode = #tpu.pipeline_mode<synchronous>, transform_indices = @transform_14, window_bounds = array<i64: 1, 64>}, {pipeline_mode = #tpu.pipeline_mode<synchronous>, transform_indices = @transform_15, window_bounds = array<i64: 64, 64>}, {pipeline_mode = #tpu.pipeline_mode<synchronous>, transform_indices = @transform_16, window_bounds = array<i64: 1, 64>}, {pipeline_mode = #tpu.pipeline_mode<synchronous>, transform_indices = @transform_17, window_bounds = array<i64: 32, 128>}, {pipeline_mode = #tpu.pipeline_mode<synchronous>, transform_indices = @transform_18, window_bounds = array<i64: 1, 128>}, {transform_indices = @transform_19, window_bounds = array<i64: 1, 24, 128>}, {transform_indices = @transform_20, window_bounds = array<i64: 1, 24, 128>}]} {
    %c0 = arith.constant 0 : index
    %c0_0 = arith.constant 0 : index
    %c0_1 = arith.constant 0 : index
    %0 = vector.load %arg1[%c0, %c0_0, %c0_1] : memref<1x24x32xbf16, #tpu.memory_space<vmem>>, vector<1x24x32xbf16>
    %1 = vector.shape_cast %0 : vector<1x24x32xbf16> to vector<24x32xbf16>
    %c0_2 = arith.constant 0 : index
    %c0_3 = arith.constant 0 : index
    %2 = vector.load %arg4[%c0_2, %c0_3] : memref<32x128xbf16, #tpu.memory_space<vmem>>, vector<32x128xbf16>
    %cst = arith.constant dense<0.000000e+00> : vector<24x128xf32>
    %3 = tpu.matmul %1, %2, %cst {dimension_numbers = #tpu.dot_dimension_numbers<[1], [0], [0], [1], [0, 0, 1, 1], [], []>} : vector<24x32xbf16>, vector<32x128xbf16>, vector<24x128xf32> -> vector<24x128xf32>
    %c0_4 = arith.constant 0 : index
    %c0_5 = arith.constant 0 : index
    %4 = vector.load %arg5[%c0_4, %c0_5] : memref<1x128xf32, #tpu.memory_space<vmem>>, vector<1x128xf32>
    %5 = vector.broadcast %4 : vector<1x128xf32> to vector<24x128xf32>
    %6 = arith.addf %3, %5 : vector<24x128xf32>
    %c0_6 = arith.constant 0 : index
    %c0_7 = arith.constant 0 : index
    %7 = vector.load %arg6[%c0_6, %c0_7] : memref<32x32xbf16, #tpu.memory_space<vmem>>, vector<32x32xbf16>
    %cst_8 = arith.constant dense<0.000000e+00> : vector<24x32xf32>
    %8 = tpu.matmul %1, %7, %cst_8 {dimension_numbers = #tpu.dot_dimension_numbers<[1], [0], [0], [1], [0, 0, 1, 1], [], []>} : vector<24x32xbf16>, vector<32x32xbf16>, vector<24x32xf32> -> vector<24x32xf32>
    %c0_9 = arith.constant 0 : index
    %c0_10 = arith.constant 0 : index
    %9 = vector.load %arg7[%c0_9, %c0_10] : memref<1x32xf32, #tpu.memory_space<vmem>>, vector<1x32xf32>
    %10 = vector.broadcast %9 : vector<1x32xf32> to vector<24x32xf32>
    %11 = arith.addf %8, %10 : vector<24x32xf32>
    %cst_11 = arith.constant 0.000000e+00 : f32
    %12 = vector.broadcast %cst_11 : f32 to vector<24x32xf32>
    %13 = arith.maximumf %11, %12 : vector<24x32xf32>
    %14 = arith.truncf %13 : vector<24x32xf32> to vector<24x32xbf16>
    %c0_12 = arith.constant 0 : index
    %c0_13 = arith.constant 0 : index
    %15 = vector.load %arg8[%c0_12, %c0_13] : memref<32x32xbf16, #tpu.memory_space<vmem>>, vector<32x32xbf16>
    %cst_14 = arith.constant dense<0.000000e+00> : vector<24x32xf32>
    %16 = tpu.matmul %14, %15, %cst_14 {dimension_numbers = #tpu.dot_dimension_numbers<[1], [0], [0], [1], [0, 0, 1, 1], [], []>} : vector<24x32xbf16>, vector<32x32xbf16>, vector<24x32xf32> -> vector<24x32xf32>
    %c0_15 = arith.constant 0 : index
    %c0_16 = arith.constant 0 : index
    %17 = vector.load %arg9[%c0_15, %c0_16] : memref<1x32xf32, #tpu.memory_space<vmem>>, vector<1x32xf32>
    %18 = vector.broadcast %17 : vector<1x32xf32> to vector<24x32xf32>
    %19 = arith.addf %16, %18 : vector<24x32xf32>
    %cst_17 = arith.constant 0.000000e+00 : f32
    %20 = vector.broadcast %cst_17 : f32 to vector<24x32xf32>
    %21 = arith.maximumf %19, %20 : vector<24x32xf32>
    %22 = arith.truncf %21 : vector<24x32xf32> to vector<24x32xbf16>
    %c0_18 = arith.constant 0 : index
    %c0_19 = arith.constant 0 : index
    %23 = vector.load %arg10[%c0_18, %c0_19] : memref<32x128xbf16, #tpu.memory_space<vmem>>, vector<32x128xbf16>
    %cst_20 = arith.constant dense<0.000000e+00> : vector<24x128xf32>
    %24 = tpu.matmul %22, %23, %cst_20 {dimension_numbers = #tpu.dot_dimension_numbers<[1], [0], [0], [1], [0, 0, 1, 1], [], []>} : vector<24x32xbf16>, vector<32x128xbf16>, vector<24x128xf32> -> vector<24x128xf32>
    %c0_21 = arith.constant 0 : index
    %c0_22 = arith.constant 0 : index
    %25 = vector.load %arg11[%c0_21, %c0_22] : memref<1x128xf32, #tpu.memory_space<vmem>>, vector<1x128xf32>
    %26 = vector.broadcast %25 : vector<1x128xf32> to vector<24x128xf32>
    %27 = arith.addf %24, %26 : vector<24x128xf32>
    %28 = tpu.iota {dimensions = array<i32: 1>} : vector<24x128xi32>
    %c6_i32 = arith.constant 6 : i32
    %29 = vector.broadcast %c6_i32 : i32 to vector<24x128xi32>
    %30 = arith.cmpi sge, %28, %29 : vector<24x128xi32>
    %c10_i32 = arith.constant 10 : i32
    %31 = vector.broadcast %c10_i32 : i32 to vector<24x128xi32>
    %32 = arith.cmpi slt, %28, %31 : vector<24x128xi32>
    %33 = arith.andi %30, %32 : vector<24x128xi1>
    %34 = arith.negf %27 : vector<24x128xf32>
    %35 = math.exp %34 : vector<24x128xf32>
    %cst_23 = arith.constant 1.000000e+00 : f32
    %36 = vector.broadcast %cst_23 : f32 to vector<24x128xf32>
    %37 = arith.addf %36, %35 : vector<24x128xf32>
    %38 = arith.divf %36, %37 : vector<24x128xf32>
    %39 = arith.select %33, %38, %6 : vector<24x128xi1>, vector<24x128xf32>
    %c0_24 = arith.constant 0 : index
    %c0_25 = arith.constant 0 : index
    %c0_26 = arith.constant 0 : index
    %40 = vector.load %arg20[%c0_24, %c0_25, %c0_26] : memref<1x24x128xf32, #tpu.memory_space<vmem>>, vector<1x24x128xf32>
    %41 = vector.shape_cast %40 : vector<1x24x128xf32> to vector<24x128xf32>
    %42 = vector.shape_cast %39 : vector<24x128xf32> to vector<1x24x128xf32>
    tpu.vector_store %arg20[%c0_24, %c0_25, %c0_26], %42 {strides = array<i32>} : memref<1x24x128xf32, #tpu.memory_space<vmem>>, vector<1x24x128xf32>,
    %c0_27 = arith.constant 0 : index
    %c0_28 = arith.constant 0 : index
    %c0_29 = arith.constant 0 : index
    %43 = vector.load %arg2[%c0_27, %c0_28, %c0_29] : memref<1x24x32xbf16, #tpu.memory_space<vmem>>, vector<1x24x32xbf16>
    %44 = vector.shape_cast %43 : vector<1x24x32xbf16> to vector<24x32xbf16>
    %c0_30 = arith.constant 0 : index
    %c0_31 = arith.constant 0 : index
    %45 = vector.load %arg18[%c0_30, %c0_31] : memref<32x128xbf16, #tpu.memory_space<vmem>>, vector<32x128xbf16>
    %cst_32 = arith.constant dense<0.000000e+00> : vector<24x128xf32>
    %46 = tpu.matmul %44, %45, %cst_32 {dimension_numbers = #tpu.dot_dimension_numbers<[1], [0], [0], [1], [0, 0, 1, 1], [], []>} : vector<24x32xbf16>, vector<32x128xbf16>, vector<24x128xf32> -> vector<24x128xf32>
    %c0_33 = arith.constant 0 : index
    %c0_34 = arith.constant 0 : index
    %47 = vector.load %arg19[%c0_33, %c0_34] : memref<1x128xf32, #tpu.memory_space<vmem>>, vector<1x128xf32>
    %48 = vector.broadcast %47 : vector<1x128xf32> to vector<24x128xf32>
    %49 = arith.addf %46, %48 : vector<24x128xf32>
    %c0_35 = arith.constant 0 : index
    %c0_36 = arith.constant 0 : index
    %50 = vector.load %arg12[%c0_35, %c0_36] : memref<32x64xbf16, #tpu.memory_space<vmem>>, vector<32x64xbf16>
    %cst_37 = arith.constant dense<0.000000e+00> : vector<24x64xf32>
    %51 = tpu.matmul %44, %50, %cst_37 {dimension_numbers = #tpu.dot_dimension_numbers<[1], [0], [0], [1], [0, 0, 1, 1], [], []>} : vector<24x32xbf16>, vector<32x64xbf16>, vector<24x64xf32> -> vector<24x64xf32>
    %c0_38 = arith.constant 0 : index
    %c0_39 = arith.constant 0 : index
    %52 = vector.load %arg13[%c0_38, %c0_39] : memref<1x64xf32, #tpu.memory_space<vmem>>, vector<1x64xf32>
    %53 = vector.broadcast %52 : vector<1x64xf32> to vector<24x64xf32>
    %54 = arith.addf %51, %53 : vector<24x64xf32>
    %cst_40 = arith.constant 0.000000e+00 : f32
    %55 = vector.broadcast %cst_40 : f32 to vector<24x64xf32>
    %56 = arith.maximumf %54, %55 : vector<24x64xf32>
    %57 = arith.truncf %56 : vector<24x64xf32> to vector<24x64xbf16>
    %c0_41 = arith.constant 0 : index
    %c0_42 = arith.constant 0 : index
    %58 = vector.load %arg14[%c0_41, %c0_42] : memref<64x64xbf16, #tpu.memory_space<vmem>>, vector<64x64xbf16>
    %cst_43 = arith.constant dense<0.000000e+00> : vector<24x64xf32>
    %59 = tpu.matmul %57, %58, %cst_43 {dimension_numbers = #tpu.dot_dimension_numbers<[1], [0], [0], [1], [0, 0, 1, 1], [], []>} : vector<24x64xbf16>, vector<64x64xbf16>, vector<24x64xf32> -> vector<24x64xf32>
    %c0_44 = arith.constant 0 : index
    %c0_45 = arith.constant 0 : index
    %60 = vector.load %arg15[%c0_44, %c0_45] : memref<1x64xf32, #tpu.memory_space<vmem>>, vector<1x64xf32>
    %61 = vector.broadcast %60 : vector<1x64xf32> to vector<24x64xf32>
    %62 = arith.addf %59, %61 : vector<24x64xf32>
    %cst_46 = arith.constant 0.000000e+00 : f32
    %63 = vector.broadcast %cst_46 : f32 to vector<24x64xf32>
    %64 = arith.maximumf %62, %63 : vector<24x64xf32>
    %65 = arith.truncf %64 : vector<24x64xf32> to vector<24x64xbf16>
    %c0_47 = arith.constant 0 : index
    %c0_48 = arith.constant 0 : index
    %66 = vector.load %arg16[%c0_47, %c0_48] : memref<64x64xbf16, #tpu.memory_space<vmem>>, vector<64x64xbf16>
    %cst_49 = arith.constant dense<0.000000e+00> : vector<24x64xf32>
    %67 = tpu.matmul %65, %66, %cst_49 {dimension_numbers = #tpu.dot_dimension_numbers<[1], [0], [0], [1], [0, 0, 1, 1], [], []>} : vector<24x64xbf16>, vector<64x64xbf16>, vector<24x64xf32> -> vector<24x64xf32>
    %c0_50 = arith.constant 0 : index
    %c0_51 = arith.constant 0 : index
    %68 = vector.load %arg17[%c0_50, %c0_51] : memref<1x64xf32, #tpu.memory_space<vmem>>, vector<1x64xf32>
    %69 = vector.broadcast %68 : vector<1x64xf32> to vector<24x64xf32>
    %70 = arith.addf %67, %69 : vector<24x64xf32>
    %71 = tpu.iota {dimensions = array<i32: 1>} : vector<24x64xi32>
    %c32_i32 = arith.constant 32 : i32
    %72 = vector.broadcast %c32_i32 : i32 to vector<24x64xi32>
    %73 = arith.cmpi slt, %71, %72 : vector<24x64xi32>
    %74 = arith.mulf %70, %70 : vector<24x64xf32>
    %cst_52 = arith.constant 0.000000e+00 : f32
    %75 = vector.broadcast %cst_52 : f32 to vector<24x64xf32>
    %76 = arith.select %73, %74, %75 : vector<24x64xi1>, vector<24x64xf32>
    %cst_53 = arith.constant dense<0.000000e+00> : vector<24xf32>
    %77 = vector.multi_reduction <add>, %76, %cst_53 [1] : vector<24x64xf32> to vector<24xf32>
    %78 = vector.shape_cast %77 : vector<24xf32> to vector<24x1xf32>
    %cst_54 = arith.constant 0.000000e+00 : f32
    %79 = vector.broadcast %cst_54 : f32 to vector<24x64xf32>
    %80 = arith.select %73, %79, %74 : vector<24x64xi1>, vector<24x64xf32>
    %cst_55 = arith.constant dense<0.000000e+00> : vector<24xf32>
    %81 = vector.multi_reduction <add>, %80, %cst_55 [1] : vector<24x64xf32> to vector<24xf32>
    %82 = vector.shape_cast %81 : vector<24xf32> to vector<24x1xf32>
    %cst_56 = arith.constant 1.000000e-24 : f32
    %83 = vector.broadcast %cst_56 : f32 to vector<24x1xf32>
    %84 = arith.maximumf %78, %83 : vector<24x1xf32>
    %85 = math.rsqrt %84 : vector<24x1xf32>
    %cst_57 = arith.constant 1.000000e-24 : f32
    %86 = vector.broadcast %cst_57 : f32 to vector<24x1xf32>
    %87 = arith.maximumf %82, %86 : vector<24x1xf32>
    %88 = math.rsqrt %87 : vector<24x1xf32>
    %89 = vector.shape_cast %85 : vector<24x1xf32> to vector<24x1xf32>
    %90 = vector.broadcast %89 : vector<24x1xf32> to vector<24x64xf32>
    %91 = vector.shape_cast %88 : vector<24x1xf32> to vector<24x1xf32>
    %92 = vector.broadcast %91 : vector<24x1xf32> to vector<24x64xf32>
    %93 = arith.select %73, %90, %92 : vector<24x64xi1>, vector<24x64xf32>
    %94 = arith.mulf %70, %93 : vector<24x64xf32>
    %95 = arith.truncf %94 : vector<24x64xf32> to vector<24x64xbf16>
    %c0_58 = arith.constant 0 : index
    %c0_59 = arith.constant 0 : index
    %c0_60 = arith.constant 0 : index
    %96 = vector.load %arg3[%c0_58, %c0_59, %c0_60] : memref<1x128x64xf32, #tpu.memory_space<vmem>>, vector<1x128x64xf32>
    %97 = vector.shape_cast %96 : vector<1x128x64xf32> to vector<128x64xf32>
    %98 = arith.mulf %97, %97 : vector<128x64xf32>
    %cst_61 = arith.constant dense<0.000000e+00> : vector<128xf32>
    %99 = vector.multi_reduction <add>, %98, %cst_61 [1] : vector<128x64xf32> to vector<128xf32>
    %100 = vector.shape_cast %99 : vector<128xf32> to vector<128x1xf32>
    %cst_62 = arith.constant 1.000000e-24 : f32
    %101 = vector.broadcast %cst_62 : f32 to vector<128x1xf32>
    %102 = arith.maximumf %100, %101 : vector<128x1xf32>
    %103 = math.rsqrt %102 : vector<128x1xf32>
    %104 = vector.broadcast %103 : vector<128x1xf32> to vector<128x64xf32>
    %105 = arith.mulf %97, %104 : vector<128x64xf32>
    %106 = arith.truncf %105 : vector<128x64xf32> to vector<128x64xbf16>
    %cst_63 = arith.constant dense<0.000000e+00> : vector<24x128xf32>
    %107 = tpu.matmul %95, %106, %cst_63 {dimension_numbers = #tpu.dot_dimension_numbers<[1], [1], [0], [0], [0, 0, 1, 0], [], []>} : vector<24x64xbf16>, vector<128x64xbf16>, vector<24x128xf32> -> vector<24x128xf32>
    %cst_64 = arith.constant 2.000000e+01 : f32
    %108 = vector.broadcast %cst_64 : f32 to vector<24x128xf32>
    %109 = arith.mulf %107, %108 : vector<24x128xf32>
    %110 = arith.addf %49, %109 : vector<24x128xf32>
    %c0_65 = arith.constant 0 : index
    %c0_66 = arith.constant 0 : index
    %c0_67 = arith.constant 0 : index
    %111 = vector.load %arg21[%c0_65, %c0_66, %c0_67] : memref<1x24x128xf32, #tpu.memory_space<vmem>>, vector<1x24x128xf32>
    %112 = vector.shape_cast %111 : vector<1x24x128xf32> to vector<24x128xf32>
    %113 = vector.shape_cast %110 : vector<24x128xf32> to vector<1x24x128xf32>
    tpu.vector_store %arg21[%c0_65, %c0_66, %c0_67], %113 {strides = array<i32>} : memref<1x24x128xf32, #tpu.memory_space<vmem>>, vector<1x24x128xf32>,
    return
  }
  func.func @transform_0(%arg0: i32) -> (i32, i32, i32) {
    %c0_i32 = arith.constant 0 : i32
    %c0_i32_0 = arith.constant 0 : i32
    %c0_i32_1 = arith.constant 0 : i32
    return %arg0, %c0_i32, %c0_i32_0 : i32, i32, i32
  }
  func.func @transform_1(%arg0: i32) -> (i32, i32, i32) {
    %c0_i32 = arith.constant 0 : i32
    %c0_i32_0 = arith.constant 0 : i32
    %c0_i32_1 = arith.constant 0 : i32
    return %arg0, %c0_i32, %c0_i32_0 : i32, i32, i32
  }
  func.func @transform_2(%arg0: i32) -> (i32, i32, i32) {
    %c0_i32 = arith.constant 0 : i32
    %c0_i32_0 = arith.constant 0 : i32
    %c0_i32_1 = arith.constant 0 : i32
    return %arg0, %c0_i32, %c0_i32_0 : i32, i32, i32
  }
  func.func @transform_3(%arg0: i32) -> (i32, i32) {
    %c0_i32 = arith.constant 0 : i32
    %c0_i32_0 = arith.constant 0 : i32
    %c0_i32_1 = arith.constant 0 : i32
    return %c0_i32, %c0_i32_0 : i32, i32
  }
  func.func @transform_4(%arg0: i32) -> (i32, i32) {
    %c0_i32 = arith.constant 0 : i32
    %c0_i32_0 = arith.constant 0 : i32
    %c0_i32_1 = arith.constant 0 : i32
    return %c0_i32, %c0_i32_0 : i32, i32
  }
  func.func @transform_5(%arg0: i32) -> (i32, i32) {
    %c0_i32 = arith.constant 0 : i32
    %c0_i32_0 = arith.constant 0 : i32
    %c0_i32_1 = arith.constant 0 : i32
    return %c0_i32, %c0_i32_0 : i32, i32
  }
  func.func @transform_6(%arg0: i32) -> (i32, i32) {
    %c0_i32 = arith.constant 0 : i32
    %c0_i32_0 = arith.constant 0 : i32
    %c0_i32_1 = arith.constant 0 : i32
    return %c0_i32, %c0_i32_0 : i32, i32
  }
  func.func @transform_7(%arg0: i32) -> (i32, i32) {
    %c0_i32 = arith.constant 0 : i32
    %c0_i32_0 = arith.constant 0 : i32
    %c0_i32_1 = arith.constant 0 : i32
    return %c0_i32, %c0_i32_0 : i32, i32
  }
  func.func @transform_8(%arg0: i32) -> (i32, i32) {
    %c0_i32 = arith.constant 0 : i32
    %c0_i32_0 = arith.constant 0 : i32
    %c0_i32_1 = arith.constant 0 : i32
    return %c0_i32, %c0_i32_0 : i32, i32
  }
  func.func @transform_9(%arg0: i32) -> (i32, i32) {
    %c0_i32 = arith.constant 0 : i32
    %c0_i32_0 = arith.constant 0 : i32
    %c0_i32_1 = arith.constant 0 : i32
    return %c0_i32, %c0_i32_0 : i32, i32
  }
  func.func @transform_10(%arg0: i32) -> (i32, i32) {
    %c0_i32 = arith.constant 0 : i32
    %c0_i32_0 = arith.constant 0 : i32
    %c0_i32_1 = arith.constant 0 : i32
    return %c0_i32, %c0_i32_0 : i32, i32
  }
  func.func @transform_11(%arg0: i32) -> (i32, i32) {
    %c0_i32 = arith.constant 0 : i32
    %c0_i32_0 = arith.constant 0 : i32
    %c0_i32_1 = arith.constant 0 : i32
    return %c0_i32, %c0_i32_0 : i32, i32
  }
  func.func @transform_12(%arg0: i32) -> (i32, i32) {
    %c0_i32 = arith.constant 0 : i32
    %c0_i32_0 = arith.constant 0 : i32
    %c0_i32_1 = arith.constant 0 : i32
    return %c0_i32, %c0_i32_0 : i32, i32
  }
  func.func @transform_13(%arg0: i32) -> (i32, i32) {
    %c0_i32 = arith.constant 0 : i32
    %c0_i32_0 = arith.constant 0 : i32
    %c0_i32_1 = arith.constant 0 : i32
    return %c0_i32, %c0_i32_0 : i32, i32
  }
  func.func @transform_14(%arg0: i32) -> (i32, i32) {
    %c0_i32 = arith.constant 0 : i32
    %c0_i32_0 = arith.constant 0 : i32
    %c0_i32_1 = arith.constant 0 : i32
    return %c0_i32, %c0_i32_0 : i32, i32
  }
  func.func @transform_15(%arg0: i32) -> (i32, i32) {
    %c0_i32 = arith.constant 0 : i32
    %c0_i32_0 = arith.constant 0 : i32
    %c0_i32_1 = arith.constant 0 : i32
    return %c0_i32, %c0_i32_0 : i32, i32
  }
  func.func @transform_16(%arg0: i32) -> (i32, i32) {
    %c0_i32 = arith.constant 0 : i32
    %c0_i32_0 = arith.constant 0 : i32
    %c0_i32_1 = arith.constant 0 : i32
    return %c0_i32, %c0_i32_0 : i32, i32
  }
  func.func @transform_17(%arg0: i32) -> (i32, i32) {
    %c0_i32 = arith.constant 0 : i32
    %c0_i32_0 = arith.constant 0 : i32
    %c0_i32_1 = arith.constant 0 : i32
    return %c0_i32, %c0_i32_0 : i32, i32
  }
  func.func @transform_18(%arg0: i32) -> (i32, i32) {
    %c0_i32 = arith.constant 0 : i32
    %c0_i32_0 = arith.constant 0 : i32
    %c0_i32_1 = arith.constant 0 : i32
    return %c0_i32, %c0_i32_0 : i32, i32
  }
  func.func @transform_19(%arg0: i32) -> (i32, i32, i32) {
    %c0_i32 = arith.constant 0 : i32
    %c0_i32_0 = arith.constant 0 : i32
    %c0_i32_1 = arith.constant 0 : i32
    return %arg0, %c0_i32, %c0_i32_0 : i32, i32, i32
  }
  func.func @transform_20(%arg0: i32) -> (i32, i32, i32) {
    %c0_i32 = arith.constant 0 : i32
    %c0_i32_0 = arith.constant 0 : i32
    %c0_i32_1 = arith.constant 0 : i32
    return %arg0, %c0_i32, %c0_i32_0 : i32, i32, i32
  }
}

</mosaic_0001>

<llo_original>
// kernel: tpu_custom_call.1
$region0: #{tpu_custom_call.1}
  #allocation0 [shape = 'u32[]', space=smem, size = 0x4, offset = 0x4, fixed_abs, tag = 'smem constant byte address 0x4 - core index']
  #allocation1 [shape = 'u32[72,128]{1,0:T(1,128)}', space=vmem, size = 0x9000, scoped, tag = 'internal scratch']
  %s0 = inlined_call_operand.vmem [shape: bf16[2,24,32], index: 0, kind: input, shape index: {}]
  %s1 = inlined_call_operand.vmem [shape: bf16[2,24,32], index: 1, kind: input, shape index: {}]
  %s2 = inlined_call_operand.vmem [shape: f32[2,128,64], index: 2, kind: input, shape index: {}]
  %s3 = inlined_call_operand.vmem [shape: bf16[32,128], index: 3, kind: input, shape index: {}]
  %s4 = inlined_call_operand.vmem [shape: f32[1,128], index: 4, kind: input, shape index: {}]
  %s5 = inlined_call_operand.vmem [shape: bf16[32,32], index: 5, kind: input, shape index: {}]
  %s6 = inlined_call_operand.vmem [shape: f32[1,32], index: 6, kind: input, shape index: {}]
  %s7 = inlined_call_operand.vmem [shape: bf16[32,32], index: 7, kind: input, shape index: {}]
  %s8 = inlined_call_operand.vmem [shape: f32[1,32], index: 8, kind: input, shape index: {}]
  %s9 = inlined_call_operand.vmem [shape: bf16[32,128], index: 9, kind: input, shape index: {}]
  %s10 = inlined_call_operand.vmem [shape: f32[1,128], index: 10, kind: input, shape index: {}]
  %s11 = inlined_call_operand.vmem [shape: bf16[32,64], index: 11, kind: input, shape index: {}]
  %s12 = inlined_call_operand.vmem [shape: f32[1,64], index: 12, kind: input, shape index: {}]
  %s13 = inlined_call_operand.vmem [shape: bf16[64,64], index: 13, kind: input, shape index: {}]
  %s14 = inlined_call_operand.vmem [shape: f32[1,64], index: 14, kind: input, shape index: {}]
  %s15 = inlined_call_operand.vmem [shape: bf16[64,64], index: 15, kind: input, shape index: {}]
  %s16 = inlined_call_operand.vmem [shape: f32[1,64], index: 16, kind: input, shape index: {}]
  %s17 = inlined_call_operand.vmem [shape: bf16[32,128], index: 17, kind: input, shape index: {}]
  %s18 = inlined_call_operand.vmem [shape: f32[1,128], index: 18, kind: input, shape index: {}]
  %s19 = inlined_call_operand.hbm [shape: f32[2,24,128], index: 19, kind: output, shape index: {0}]
  %s20 = inlined_call_operand.hbm [shape: f32[2,24,128], index: 20, kind: output, shape index: {1}]
  %21 = xla_tuple %s19, %s20
  %s22 = sld [smem:[#allocation0]]
  $region117: #{tpu_custom_call.1} parent=0
    _
  %s24 = ssub.s32 1, %s22
  %s25 = scalar_select 0, %s24, %s22
  $region1: #{tpu_custom_call.1} parent=0
    #allocation2 [shape = 'u8[24576]{0}', space=vmem, size = 0x6000, scoped, tag = 'output window, operand 0']
    #allocation3 [shape = 's32[2]{0}', space=sflag, size = 0x8, scoped, tag = 'scoped memory for tpu_custom_call.1']
    #allocation4 [shape = 'u8[24576]{0}', space=vmem, size = 0x6000, scoped, tag = 'output window, operand 1']
    #allocation5 [shape = 's32[2]{0}', space=sflag, size = 0x8, scoped, tag = 'scoped memory for tpu_custom_call.1']
    %26 = vsyncpa [#allocation3], 0
    %s27 = scalar_lea.sflag [#allocation3], 1
    %28 = vsyncpa %s27, 0
    %29 = vsyncpa [#allocation5], 0
    %s30 = scalar_lea.sflag [#allocation5], 1
    %31 = vsyncpa %s30, 0
    loop: start=0, step=1, limit=4
    $region2: #{tpu_custom_call.1} parent=1 // loop_pre_header
      _
    $region3: #{tpu_custom_call.1} parent=1 // loop_header
      %s33 = sphi 0, %s37
      %p34 = scmp.ge.s32.totalorder %s33, 4
      %s43 = sphi 0, %s45
      %s46 = sphi 0, %s43
      %s47 = sphi 0, %s46
      %s63 = sphi 0, %s47
      %s69 = sphi 0, %s71
      %s72 = sphi 0, %s69
      %s73 = sphi 0, %s72
      %s89 = sphi 0, %s73
      %s95 = sphi 0, %s97
      %s98 = sphi 0, %s95
      %s99 = sphi 0, %s98
      %s115 = sphi 0, %s99
      %s119 = sphi 0, %s119
      %s121 = sphi 0, %s119
      %s122 = sphi 0, %s121
      %s136 = sphi 0, %s122
      %s140 = sphi 0, %s140
      %s142 = sphi 0, %s140
      %s143 = sphi 0, %s142
      %s157 = sphi 0, %s143
      %s161 = sphi 0, %s161
      %s163 = sphi 0, %s161
      %s164 = sphi 0, %s163
      %s178 = sphi 0, %s164
      %s182 = sphi 0, %s182
      %s184 = sphi 0, %s182
      %s185 = sphi 0, %s184
      %s199 = sphi 0, %s185
      %s203 = sphi 0, %s203
      %s205 = sphi 0, %s203
      %s206 = sphi 0, %s205
      %s220 = sphi 0, %s206
      %s224 = sphi 0, %s224
      %s226 = sphi 0, %s224
      %s227 = sphi 0, %s226
      %s241 = sphi 0, %s227
      %s245 = sphi 0, %s245
      %s247 = sphi 0, %s245
      %s248 = sphi 0, %s247
      %s262 = sphi 0, %s248
      %s266 = sphi 0, %s266
      %s268 = sphi 0, %s266
      %s269 = sphi 0, %s268
      %s283 = sphi 0, %s269
      %s287 = sphi 0, %s287
      %s289 = sphi 0, %s287
      %s290 = sphi 0, %s289
      %s304 = sphi 0, %s290
      %s308 = sphi 0, %s308
      %s310 = sphi 0, %s308
      %s311 = sphi 0, %s310
      %s325 = sphi 0, %s311
      %s329 = sphi 0, %s329
      %s331 = sphi 0, %s329
      %s332 = sphi 0, %s331
      %s346 = sphi 0, %s332
      %s350 = sphi 0, %s350
      %s352 = sphi 0, %s350
      %s353 = sphi 0, %s352
      %s367 = sphi 0, %s353
      %s371 = sphi 0, %s371
      %s373 = sphi 0, %s371
      %s374 = sphi 0, %s373
      %s388 = sphi 0, %s374
      %s392 = sphi 0, %s392
      %s394 = sphi 0, %s392
      %s395 = sphi 0, %s394
      %s409 = sphi 0, %s395
      %s413 = sphi 0, %s413
      %s415 = sphi 0, %s413
      %s416 = sphi 0, %s415
      %s430 = sphi 0, %s416
      %s434 = sphi 0, %s434
      %s436 = sphi 0, %s434
      %s437 = sphi 0, %s436
      %s451 = sphi 0, %s437
      %s457 = sphi 0, %s459
      %s460 = sphi 0, %s457
      %s461 = sphi 0, %s460
      %s477 = sphi 0, %s461
      %s483 = sphi 0, %s485
      %s486 = sphi 0, %s483
      %s487 = sphi 0, %s486
      %s503 = sphi 0, %s487
    $region4: #{tpu_custom_call.1} parent=1 // loop_header_branch
      %36 = sbr.rel (%p34) target = $region8
    $region5: #{tpu_custom_call.1} parent=1 // loop_body
      %s38 = ssub.s32 %s33, 1
      %s39 = ssub.s32 %s33, 2
      %s40 = sadd.s32 %s33, 1
      %s41 = ssub.s32 %s33, %s40
      %p42 = scmp.eq.s32.totalorder %s41, 0
      %s44 = sadd.s32 %s43, 1
      %s45 = scalar_select %p42, %s43, %s44
      %p48 = pneg %p42
      %p49 = scmp.eq.s32.totalorder %s33, 1
      %p50 = por %p48, %p49
      %p51 = scmp.ne.s32.totalorder %s43, %s46
      %p52 = scmp.eq.s32.totalorder %s33, 0
      %p53 = por %p51, %p52
      %p54 = scmp.ne.s32.totalorder %s43, %s46
      %p55 = scmp.eq.s32.totalorder %s38, 1
      %p56 = por %p54, %p55
      %p57 = scmp.ne.s32.totalorder %s46, %s47
      %p58 = scmp.eq.s32.totalorder %s38, 0
      %p59 = por %p57, %p58
      %p60 = scmp.ne.s32.totalorder %s46, %s47
      %p61 = scmp.eq.s32.totalorder %s39, 1
      %p62 = por %p60, %p61
      %p64 = scmp.ne.s32.totalorder %s47, %s63
      %p65 = scmp.eq.s32.totalorder %s39, 0
      %p66 = por %p64, %p65
      %s67 = ssub.s32 %s33, %s40
      %p68 = scmp.eq.s32.totalorder %s67, 0
      %s70 = sadd.s32 %s69, 1
      %s71 = scalar_select %p68, %s69, %s70
      %p74 = pneg %p68
      %p75 = scmp.eq.s32.totalorder %s33, 1
      %p76 = por %p74, %p75
      %p77 = scmp.ne.s32.totalorder %s69, %s72
      %p78 = scmp.eq.s32.totalorder %s33, 0
      %p79 = por %p77, %p78
      %p80 = scmp.ne.s32.totalorder %s69, %s72
      %p81 = scmp.eq.s32.totalorder %s38, 1
      %p82 = por %p80, %p81
      %p83 = scmp.ne.s32.totalorder %s72, %s73
      %p84 = scmp.eq.s32.totalorder %s38, 0
      %p85 = por %p83, %p84
      %p86 = scmp.ne.s32.totalorder %s72, %s73
      %p87 = scmp.eq.s32.totalorder %s39, 1
      %p88 = por %p86, %p87
      %p90 = scmp.ne.s32.totalorder %s73, %s89
      %p91 = scmp.eq.s32.totalorder %s39, 0
      %p92 = por %p90, %p91
      %s93 = ssub.s32 %s33, %s40
      %p94 = scmp.eq.s32.totalorder %s93, 0
      %s96 = sadd.s32 %s95, 1
      %s97 = scalar_select %p94, %s95, %s96
      %p100 = pneg %p94
      %p101 = scmp.eq.s32.totalorder %s33, 1
      %p102 = por %p100, %p101
      %p103 = scmp.ne.s32.totalorder %s95, %s98
      %p104 = scmp.eq.s32.totalorder %s33, 0
      %p105 = por %p103, %p104
      %p106 = scmp.ne.s32.totalorder %s95, %s98
      %p107 = scmp.eq.s32.totalorder %s38, 1
      %p108 = por %p106, %p107
      %p109 = scmp.ne.s32.totalorder %s98, %s99
      %p110 = scmp.eq.s32.totalorder %s38, 0
      %p111 = por %p109, %p110
      %p112 = scmp.ne.s32.totalorder %s98, %s99
      %p113 = scmp.eq.s32.totalorder %s39, 1
      %p114 = por %p112, %p113
      %p116 = scmp.ne.s32.totalorder %s99, %s115
      %p117 = scmp.eq.s32.totalorder %s39, 0
      %p118 = por %p116, %p117
      %s120 = sadd.s32 %s119, 1
      %p123 = scmp.eq.s32.totalorder %s33, 1
      %p124 = scmp.ne.s32.totalorder %s119, %s121
      %p125 = scmp.eq.s32.totalorder %s33, 0
      %p126 = por %p124, %p125
      %p127 = scmp.ne.s32.totalorder %s119, %s121
      %p128 = scmp.eq.s32.totalorder %s38, 1
      %p129 = por %p127, %p128
      %p130 = scmp.ne.s32.totalorder %s121, %s122
      %p131 = scmp.eq.s32.totalorder %s38, 0
      %p132 = por %p130, %p131
      %p133 = scmp.ne.s32.totalorder %s121, %s122
      %p134 = scmp.eq.s32.totalorder %s39, 1
      %p135 = por %p133, %p134
      %p137 = scmp.ne.s32.totalorder %s122, %s136
      %p138 = scmp.eq.s32.totalorder %s39, 0
      %p139 = por %p137, %p138
      %s141 = sadd.s32 %s140, 1
      %p144 = scmp.eq.s32.totalorder %s33, 1
      %p145 = scmp.ne.s32.totalorder %s140, %s142
      %p146 = scmp.eq.s32.totalorder %s33, 0
      %p147 = por %p145, %p146
      %p148 = scmp.ne.s32.totalorder %s140, %s142
      %p149 = scmp.eq.s32.totalorder %s38, 1
      %p150 = por %p148, %p149
      %p151 = scmp.ne.s32.totalorder %s142, %s143
      %p152 = scmp.eq.s32.totalorder %s38, 0
      %p153 = por %p151, %p152
      %p154 = scmp.ne.s32.totalorder %s142, %s143
      %p155 = scmp.eq.s32.totalorder %s39, 1
      %p156 = por %p154, %p155
      %p158 = scmp.ne.s32.totalorder %s143, %s157
      %p159 = scmp.eq.s32.totalorder %s39, 0
      %p160 = por %p158, %p159
      %s162 = sadd.s32 %s161, 1
      %p165 = scmp.eq.s32.totalorder %s33, 1
      %p166 = scmp.ne.s32.totalorder %s161, %s163
      %p167 = scmp.eq.s32.totalorder %s33, 0
      %p168 = por %p166, %p167
      %p169 = scmp.ne.s32.totalorder %s161, %s163
      %p170 = scmp.eq.s32.totalorder %s38, 1
      %p171 = por %p169, %p170
      %p172 = scmp.ne.s32.totalorder %s163, %s164
      %p173 = scmp.eq.s32.totalorder %s38, 0
      %p174 = por %p172, %p173
      %p175 = scmp.ne.s32.totalorder %s163, %s164
      %p176 = scmp.eq.s32.totalorder %s39, 1
      %p177 = por %p175, %p176
      %p179 = scmp.ne.s32.totalorder %s164, %s178
      %p180 = scmp.eq.s32.totalorder %s39, 0
      %p181 = por %p179, %p180
      %s183 = sadd.s32 %s182, 1
      %p186 = scmp.eq.s32.totalorder %s33, 1
      %p187 = scmp.ne.s32.totalorder %s182, %s184
      %p188 = scmp.eq.s32.totalorder %s33, 0
      %p189 = por %p187, %p188
      %p190 = scmp.ne.s32.totalorder %s182, %s184
      %p191 = scmp.eq.s32.totalorder %s38, 1
      %p192 = por %p190, %p191
      %p193 = scmp.ne.s32.totalorder %s184, %s185
      %p194 = scmp.eq.s32.totalorder %s38, 0
      %p195 = por %p193, %p194
      %p196 = scmp.ne.s32.totalorder %s184, %s185
      %p197 = scmp.eq.s32.totalorder %s39, 1
      %p198 = por %p196, %p197
      %p200 = scmp.ne.s32.totalorder %s185, %s199
      %p201 = scmp.eq.s32.totalorder %s39, 0
      %p202 = por %p200, %p201
      %s204 = sadd.s32 %s203, 1
      %p207 = scmp.eq.s32.totalorder %s33, 1
      %p208 = scmp.ne.s32.totalorder %s203, %s205
      %p209 = scmp.eq.s32.totalorder %s33, 0
      %p210 = por %p208, %p209
      %p211 = scmp.ne.s32.totalorder %s203, %s205
      %p212 = scmp.eq.s32.totalorder %s38, 1
      %p213 = por %p211, %p212
      %p214 = scmp.ne.s32.totalorder %s205, %s206
      %p215 = scmp.eq.s32.totalorder %s38, 0
      %p216 = por %p214, %p215
      %p217 = scmp.ne.s32.totalorder %s205, %s206
      %p218 = scmp.eq.s32.totalorder %s39, 1
      %p219 = por %p217, %p218
      %p221 = scmp.ne.s32.totalorder %s206, %s220
      %p222 = scmp.eq.s32.totalorder %s39, 0
      %p223 = por %p221, %p222
      %s225 = sadd.s32 %s224, 1
      %p228 = scmp.eq.s32.totalorder %s33, 1
      %p229 = scmp.ne.s32.totalorder %s224, %s226
      %p230 = scmp.eq.s32.totalorder %s33, 0
      %p231 = por %p229, %p230
      %p232 = scmp.ne.s32.totalorder %s224, %s226
      %p233 = scmp.eq.s32.totalorder %s38, 1
      %p234 = por %p232, %p233
      %p235 = scmp.ne.s32.totalorder %s226, %s227
      %p236 = scmp.eq.s32.totalorder %s38, 0
      %p237 = por %p235, %p236
      %p238 = scmp.ne.s32.totalorder %s226, %s227
      %p239 = scmp.eq.s32.totalorder %s39, 1
      %p240 = por %p238, %p239
      %p242 = scmp.ne.s32.totalorder %s227, %s241
      %p243 = scmp.eq.s32.totalorder %s39, 0
      %p244 = por %p242, %p243
      %s246 = sadd.s32 %s245, 1
      %p249 = scmp.eq.s32.totalorder %s33, 1
      %p250 = scmp.ne.s32.totalorder %s245, %s247
      %p251 = scmp.eq.s32.totalorder %s33, 0
      %p252 = por %p250, %p251
      %p253 = scmp.ne.s32.totalorder %s245, %s247
      %p254 = scmp.eq.s32.totalorder %s38, 1
      %p255 = por %p253, %p254
      %p256 = scmp.ne.s32.totalorder %s247, %s248
      %p257 = scmp.eq.s32.totalorder %s38, 0
      %p258 = por %p256, %p257
      %p259 = scmp.ne.s32.totalorder %s247, %s248
      %p260 = scmp.eq.s32.totalorder %s39, 1
      %p261 = por %p259, %p260
      %p263 = scmp.ne.s32.totalorder %s248, %s262
      %p264 = scmp.eq.s32.totalorder %s39, 0
      %p265 = por %p263, %p264
      %s267 = sadd.s32 %s266, 1
      %p270 = scmp.eq.s32.totalorder %s33, 1
      %p271 = scmp.ne.s32.totalorder %s266, %s268
      %p272 = scmp.eq.s32.totalorder %s33, 0
      %p273 = por %p271, %p272
      %p274 = scmp.ne.s32.totalorder %s266, %s268
      %p275 = scmp.eq.s32.totalorder %s38, 1
      %p276 = por %p274, %p275
      %p277 = scmp.ne.s32.totalorder %s268, %s269
      %p278 = scmp.eq.s32.totalorder %s38, 0
      %p279 = por %p277, %p278
      %p280 = scmp.ne.s32.totalorder %s268, %s269
      %p281 = scmp.eq.s32.totalorder %s39, 1
      %p282 = por %p280, %p281
      %p284 = scmp.ne.s32.totalorder %s269, %s283
      %p285 = scmp.eq.s32.totalorder %s39, 0
      %p286 = por %p284, %p285
      %s288 = sadd.s32 %s287, 1
      %p291 = scmp.eq.s32.totalorder %s33, 1
      %p292 = scmp.ne.s32.totalorder %s287, %s289
      %p293 = scmp.eq.s32.totalorder %s33, 0
      %p294 = por %p292, %p293
      %p295 = scmp.ne.s32.totalorder %s287, %s289
      %p296 = scmp.eq.s32.totalorder %s38, 1
      %p297 = por %p295, %p296
      %p298 = scmp.ne.s32.totalorder %s289, %s290
      %p299 = scmp.eq.s32.totalorder %s38, 0
      %p300 = por %p298, %p299
      %p301 = scmp.ne.s32.totalorder %s289, %s290
      %p302 = scmp.eq.s32.totalorder %s39, 1
      %p303 = por %p301, %p302
      %p305 = scmp.ne.s32.totalorder %s290, %s304
      %p306 = scmp.eq.s32.totalorder %s39, 0
      %p307 = por %p305, %p306
      %s309 = sadd.s32 %s308, 1
      %p312 = scmp.eq.s32.totalorder %s33, 1
      %p313 = scmp.ne.s32.totalorder %s308, %s310
      %p314 = scmp.eq.s32.totalorder %s33, 0
      %p315 = por %p313, %p314
      %p316 = scmp.ne.s32.totalorder %s308, %s310
      %p317 = scmp.eq.s32.totalorder %s38, 1
      %p318 = por %p316, %p317
      %p319 = scmp.ne.s32.totalorder %s310, %s311
      %p320 = scmp.eq.s32.totalorder %s38, 0
      %p321 = por %p319, %p320
      %p322 = scmp.ne.s32.totalorder %s310, %s311
      %p323 = scmp.eq.s32.totalorder %s39, 1
      %p324 = por %p322, %p323
      %p326 = scmp.ne.s32.totalorder %s311, %s325
      %p327 = scmp.eq.s32.totalorder %s39, 0
      %p328 = por %p326, %p327
      %s330 = sadd.s32 %s329, 1
      %p333 = scmp.eq.s32.totalorder %s33, 1
      %p334 = scmp.ne.s32.totalorder %s329, %s331
      %p335 = scmp.eq.s32.totalorder %s33, 0
      %p336 = por %p334, %p335
      %p337 = scmp.ne.s32.totalorder %s329, %s331
      %p338 = scmp.eq.s32.totalorder %s38, 1
      %p339 = por %p337, %p338
      %p340 = scmp.ne.s32.totalorder %s331, %s332
      %p341 = scmp.eq.s32.totalorder %s38, 0
      %p342 = por %p340, %p341
      %p343 = scmp.ne.s32.totalorder %s331, %s332
      %p344 = scmp.eq.s32.totalorder %s39, 1
      %p345 = por %p343, %p344
      %p347 = scmp.ne.s32.totalorder %s332, %s346
      %p348 = scmp.eq.s32.totalorder %s39, 0
      %p349 = por %p347, %p348
      %s351 = sadd.s32 %s350, 1
      %p354 = scmp.eq.s32.totalorder %s33, 1
      %p355 = scmp.ne.s32.totalorder %s350, %s352
      %p356 = scmp.eq.s32.totalorder %s33, 0
      %p357 = por %p355, %p356
      %p358 = scmp.ne.s32.totalorder %s350, %s352
      %p359 = scmp.eq.s32.totalorder %s38, 1
      %p360 = por %p358, %p359
      %p361 = scmp.ne.s32.totalorder %s352, %s353
      %p362 = scmp.eq.s32.totalorder %s38, 0
      %p363 = por %p361, %p362
      %p364 = scmp.ne.s32.totalorder %s352, %s353
      %p365 = scmp.eq.s32.totalorder %s39, 1
      %p366 = por %p364, %p365
      %p368 = scmp.ne.s32.totalorder %s353, %s367
      %p369 = scmp.eq.s32.totalorder %s39, 0
      %p370 = por %p368, %p369
      %s372 = sadd.s32 %s371, 1
      %p375 = scmp.eq.s32.totalorder %s33, 1
      %p376 = scmp.ne.s32.totalorder %s371, %s373
      %p377 = scmp.eq.s32.totalorder %s33, 0
      %p378 = por %p376, %p377
      %p379 = scmp.ne.s32.totalorder %s371, %s373
      %p380 = scmp.eq.s32.totalorder %s38, 1
      %p381 = por %p379, %p380
      %p382 = scmp.ne.s32.totalorder %s373, %s374
      %p383 = scmp.eq.s32.totalorder %s38, 0
      %p384 = por %p382, %p383
      %p385 = scmp.ne.s32.totalorder %s373, %s374
      %p386 = scmp.eq.s32.totalorder %s39, 1
      %p387 = por %p385, %p386
      %p389 = scmp.ne.s32.totalorder %s374, %s388
      %p390 = scmp.eq.s32.totalorder %s39, 0
      %p391 = por %p389, %p390
      %s393 = sadd.s32 %s392, 1
      %p396 = scmp.eq.s32.totalorder %s33, 1
      %p397 = scmp.ne.s32.totalorder %s392, %s394
      %p398 = scmp.eq.s32.totalorder %s33, 0
      %p399 = por %p397, %p398
      %p400 = scmp.ne.s32.totalorder %s392, %s394
      %p401 = scmp.eq.s32.totalorder %s38, 1
      %p402 = por %p400, %p401
      %p403 = scmp.ne.s32.totalorder %s394, %s395
      %p404 = scmp.eq.s32.totalorder %s38, 0
      %p405 = por %p403, %p404
      %p406 = scmp.ne.s32.totalorder %s394, %s395
      %p407 = scmp.eq.s32.totalorder %s39, 1
      %p408 = por %p406, %p407
      %p410 = scmp.ne.s32.totalorder %s395, %s409
      %p411 = scmp.eq.s32.totalorder %s39, 0
      %p412 = por %p410, %p411
      %s414 = sadd.s32 %s413, 1
      %p417 = scmp.eq.s32.totalorder %s33, 1
      %p418 = scmp.ne.s32.totalorder %s413, %s415
      %p419 = scmp.eq.s32.totalorder %s33, 0
      %p420 = por %p418, %p419
      %p421 = scmp.ne.s32.totalorder %s413, %s415
      %p422 = scmp.eq.s32.totalorder %s38, 1
      %p423 = por %p421, %p422
      %p424 = scmp.ne.s32.totalorder %s415, %s416
      %p425 = scmp.eq.s32.totalorder %s38, 0
      %p426 = por %p424, %p425
      %p427 = scmp.ne.s32.totalorder %s415, %s416
      %p428 = scmp.eq.s32.totalorder %s39, 1
      %p429 = por %p427, %p428
      %p431 = scmp.ne.s32.totalorder %s416, %s430
      %p432 = scmp.eq.s32.totalorder %s39, 0
      %p433 = por %p431, %p432
      %s435 = sadd.s32 %s434, 1
      %p438 = scmp.eq.s32.totalorder %s33, 1
      %p439 = scmp.ne.s32.totalorder %s434, %s436
      %p440 = scmp.eq.s32.totalorder %s33, 0
      %p441 = por %p439, %p440
      %p442 = scmp.ne.s32.totalorder %s434, %s436
      %p443 = scmp.eq.s32.totalorder %s38, 1
      %p444 = por %p442, %p443
      %p445 = scmp.ne.s32.totalorder %s436, %s437
      %p446 = scmp.eq.s32.totalorder %s38, 0
      %p447 = por %p445, %p446
      %p448 = scmp.ne.s32.totalorder %s436, %s437
      %p449 = scmp.eq.s32.totalorder %s39, 1
      %p450 = por %p448, %p449
      %p452 = scmp.ne.s32.totalorder %s437, %s451
      %p453 = scmp.eq.s32.totalorder %s39, 0
      %p454 = por %p452, %p453
      %s455 = ssub.s32 %s33, %s40
      %p456 = scmp.eq.s32.totalorder %s455, 0
      %s458 = sadd.s32 %s457, 1
      %s459 = scalar_select %p456, %s457, %s458
      %p462 = pneg %p456
      %p463 = scmp.eq.s32.totalorder %s33, 1
      %p464 = por %p462, %p463
      %p465 = scmp.ne.s32.totalorder %s457, %s460
      %p466 = scmp.eq.s32.totalorder %s33, 0
      %p467 = por %p465, %p466
      %p468 = scmp.ne.s32.totalorder %s457, %s460
      %p469 = scmp.eq.s32.totalorder %s38, 1
      %p470 = por %p468, %p469
      %p471 = scmp.ne.s32.totalorder %s460, %s461
      %p472 = scmp.eq.s32.totalorder %s38, 0
      %p473 = por %p471, %p472
      %p474 = scmp.ne.s32.totalorder %s460, %s461
      %p475 = scmp.eq.s32.totalorder %s39, 1
      %p476 = por %p474, %p475
      %p478 = scmp.ne.s32.totalorder %s461, %s477
      %p479 = scmp.eq.s32.totalorder %s39, 0
      %p480 = por %p478, %p479
      %s481 = ssub.s32 %s33, %s40
      %p482 = scmp.eq.s32.totalorder %s481, 0
      %s484 = sadd.s32 %s483, 1
      %s485 = scalar_select %p482, %s483, %s484
      %p488 = pneg %p482
      %p489 = scmp.eq.s32.totalorder %s33, 1
      %p490 = por %p488, %p489
      %p491 = scmp.ne.s32.totalorder %s483, %s486
      %p492 = scmp.eq.s32.totalorder %s33, 0
      %p493 = por %p491, %p492
      %p494 = scmp.ne.s32.totalorder %s483, %s486
      %p495 = scmp.eq.s32.totalorder %s38, 1
      %p496 = por %p494, %p495
      %p497 = scmp.ne.s32.totalorder %s486, %s487
      %p498 = scmp.eq.s32.totalorder %s38, 0
      %p499 = por %p497, %p498
      %p500 = scmp.ne.s32.totalorder %s486, %s487
      %p501 = scmp.eq.s32.totalorder %s39, 1
      %p502 = por %p500, %p501
      %p504 = scmp.ne.s32.totalorder %s487, %s503
      %p505 = scmp.eq.s32.totalorder %s39, 0
      %p506 = por %p504, %p505
      %p507 = scmp.le.s32.totalorder 1, %s33
      %p508 = scmp.lt.s32.totalorder %s33, 3
      %p509 = pnand %p507, %p508
      %p510 = pneg %p509
      // Predicated region
      $region9: #{tpu_custom_call.1} parent=5 // pred_check
        _
      $region10: #{tpu_custom_call.1} parent=5 // pred_check_branch
        %512 = sbr.rel (%p509) target = $region12
      $region11: #{tpu_custom_call.1} parent=5 // pred_region
        %s513 = ssub.s32 %s33, 1
        // Predicated region
        $region13: #{tpu_custom_call.1} parent=11 // pred_check
          %p514 = pneg %p132
        $region14: #{tpu_custom_call.1} parent=11 // pred_check_branch
          %516 = sbr.rel (%p514) target = $region16
        $region15: #{tpu_custom_call.1} parent=11 // pred_region
          _
        $region16: #{tpu_custom_call.1} parent=11 // pred_fallthru
          _
        // Predicated region
        $region17: #{tpu_custom_call.1} parent=11 // pred_check
          %p517 = pneg %p153
        $region18: #{tpu_custom_call.1} parent=11 // pred_check_branch
          %519 = sbr.rel (%p517) target = $region20
        $region19: #{tpu_custom_call.1} parent=11 // pred_region
          _
        $region20: #{tpu_custom_call.1} parent=11 // pred_fallthru
          _
        // Predicated region
        $region21: #{tpu_custom_call.1} parent=11 // pred_check
          %p520 = pneg %p174
        $region22: #{tpu_custom_call.1} parent=11 // pred_check_branch
          %522 = sbr.rel (%p520) target = $region24
        $region23: #{tpu_custom_call.1} parent=11 // pred_region
          _
        $region24: #{tpu_custom_call.1} parent=11 // pred_fallthru
          _
        // Predicated region
        $region25: #{tpu_custom_call.1} parent=11 // pred_check
          %p523 = pneg %p195
        $region26: #{tpu_custom_call.1} parent=11 // pred_check_branch
          %525 = sbr.rel (%p523) target = $region28
        $region27: #{tpu_custom_call.1} parent=11 // pred_region
          _
        $region28: #{tpu_custom_call.1} parent=11 // pred_fallthru
          _
        // Predicated region
        $region29: #{tpu_custom_call.1} parent=11 // pred_check
          %p526 = pneg %p216
        $region30: #{tpu_custom_call.1} parent=11 // pred_check_branch
          %528 = sbr.rel (%p526) target = $region32
        $region31: #{tpu_custom_call.1} parent=11 // pred_region
          _
        $region32: #{tpu_custom_call.1} parent=11 // pred_fallthru
          _
        // Predicated region
        $region33: #{tpu_custom_call.1} parent=11 // pred_check
          %p529 = pneg %p237
        $region34: #{tpu_custom_call.1} parent=11 // pred_check_branch
          %531 = sbr.rel (%p529) target = $region36
        $region35: #{tpu_custom_call.1} parent=11 // pred_region
          _
        $region36: #{tpu_custom_call.1} parent=11 // pred_fallthru
          _
        // Predicated region
        $region37: #{tpu_custom_call.1} parent=11 // pred_check
          %p532 = pneg %p258
        $region38: #{tpu_custom_call.1} parent=11 // pred_check_branch
          %534 = sbr.rel (%p532) target = $region40
        $region39: #{tpu_custom_call.1} parent=11 // pred_region
          _
        $region40: #{tpu_custom_call.1} parent=11 // pred_fallthru
          _
        // Predicated region
        $region41: #{tpu_custom_call.1} parent=11 // pred_check
          %p535 = pneg %p279
        $region42: #{tpu_custom_call.1} parent=11 // pred_check_branch
          %537 = sbr.rel (%p535) target = $region44
        $region43: #{tpu_custom_call.1} parent=11 // pred_region
          _
        $region44: #{tpu_custom_call.1} parent=11 // pred_fallthru
          _
        // Predicated region
        $region45: #{tpu_custom_call.1} parent=11 // pred_check
          %p538 = pneg %p300
        $region46: #{tpu_custom_call.1} parent=11 // pred_check_branch
          %540 = sbr.rel (%p538) target = $region48
        $region47: #{tpu_custom_call.1} parent=11 // pred_region
          _
        $region48: #{tpu_custom_call.1} parent=11 // pred_fallthru
          _
        // Predicated region
        $region49: #{tpu_custom_call.1} parent=11 // pred_check
          %p541 = pneg %p321
        $region50: #{tpu_custom_call.1} parent=11 // pred_check_branch
          %543 = sbr.rel (%p541) target = $region52
        $region51: #{tpu_custom_call.1} parent=11 // pred_region
          _
        $region52: #{tpu_custom_call.1} parent=11 // pred_fallthru
          _
        // Predicated region
        $region53: #{tpu_custom_call.1} parent=11 // pred_check
          %p544 = pneg %p342
        $region54: #{tpu_custom_call.1} parent=11 // pred_check_branch
          %546 = sbr.rel (%p544) target = $region56
        $region55: #{tpu_custom_call.1} parent=11 // pred_region
          _
        $region56: #{tpu_custom_call.1} parent=11 // pred_fallthru
          _
        // Predicated region
        $region57: #{tpu_custom_call.1} parent=11 // pred_check
          %p547 = pneg %p363
        $region58: #{tpu_custom_call.1} parent=11 // pred_check_branch
          %549 = sbr.rel (%p547) target = $region60
        $region59: #{tpu_custom_call.1} parent=11 // pred_region
          _
        $region60: #{tpu_custom_call.1} parent=11 // pred_fallthru
          _
        // Predicated region
        $region61: #{tpu_custom_call.1} parent=11 // pred_check
          %p550 = pneg %p384
        $region62: #{tpu_custom_call.1} parent=11 // pred_check_branch
          %552 = sbr.rel (%p550) target = $region64
        $region63: #{tpu_custom_call.1} parent=11 // pred_region
          _
        $region64: #{tpu_custom_call.1} parent=11 // pred_fallthru
          _
        // Predicated region
        $region65: #{tpu_custom_call.1} parent=11 // pred_check
          %p553 = pneg %p405
        $region66: #{tpu_custom_call.1} parent=11 // pred_check_branch
          %555 = sbr.rel (%p553) target = $region68
        $region67: #{tpu_custom_call.1} parent=11 // pred_region
          _
        $region68: #{tpu_custom_call.1} parent=11 // pred_fallthru
          _
        // Predicated region
        $region69: #{tpu_custom_call.1} parent=11 // pred_check
          %p556 = pneg %p426
        $region70: #{tpu_custom_call.1} parent=11 // pred_check_branch
          %558 = sbr.rel (%p556) target = $region72
        $region71: #{tpu_custom_call.1} parent=11 // pred_region
          _
        $region72: #{tpu_custom_call.1} parent=11 // pred_fallthru
          _
        // Predicated region
        $region73: #{tpu_custom_call.1} parent=11 // pred_check
          %p559 = pneg %p447
        $region74: #{tpu_custom_call.1} parent=11 // pred_check_branch
          %561 = sbr.rel (%p559) target = $region76
        $region75: #{tpu_custom_call.1} parent=11 // pred_region
          _
        $region76: #{tpu_custom_call.1} parent=11 // pred_fallthru
          _
      $region12: #{tpu_custom_call.1} parent=5 // pred_fallthru
        _
      %p562 = scmp.lt.s32.totalorder %s33, 2
      // Predicated region
      $region77: #{tpu_custom_call.1} parent=5 // pred_check
        %p563 = pneg %p562
      $region78: #{tpu_custom_call.1} parent=5 // pred_check_branch
        %565 = sbr.rel (%p563) target = $region80
      $region79: #{tpu_custom_call.1} parent=5 // pred_region
        // Predicated region
        $region81: #{tpu_custom_call.1} parent=79 // pred_check
          %p566 = pneg %p53
        $region82: #{tpu_custom_call.1} parent=79 // pred_check_branch
          %568 = sbr.rel (%p566) target = $region84
        $region83: #{tpu_custom_call.1} parent=79 // pred_region
          %p569 = scmp.lt.s32.totalorder %s33, 1
          %s570 = scalar_select %p569, %s33, 1
          %s571 = smul.addr %s570, 3
          %s572 = smul.addr %s571, 4
          %s573 = scalar_lea.vmem %s0, %s572
        $region84: #{tpu_custom_call.1} parent=79 // pred_fallthru
          _
        // Predicated region
        $region85: #{tpu_custom_call.1} parent=79 // pred_check
          %p574 = pneg %p79
        $region86: #{tpu_custom_call.1} parent=79 // pred_check_branch
          %576 = sbr.rel (%p574) target = $region88
        $region87: #{tpu_custom_call.1} parent=79 // pred_region
          %p577 = scmp.lt.s32.totalorder %s33, 1
          %s578 = scalar_select %p577, %s33, 1
          %s579 = smul.addr %s578, 3
          %s580 = smul.addr %s579, 4
          %s581 = scalar_lea.vmem %s1, %s580
        $region88: #{tpu_custom_call.1} parent=79 // pred_fallthru
          _
        // Predicated region
        $region89: #{tpu_custom_call.1} parent=79 // pred_check
          %p582 = pneg %p105
        $region90: #{tpu_custom_call.1} parent=79 // pred_check_branch
          %584 = sbr.rel (%p582) target = $region92
        $region91: #{tpu_custom_call.1} parent=79 // pred_region
          %p585 = scmp.lt.s32.totalorder %s33, 1
          %s586 = scalar_select %p585, %s33, 1
          %s587 = smul.addr %s586, 16
          %s588 = smul.addr %s587, 8
          %s589 = scalar_lea.vmem %s2, %s588
        $region92: #{tpu_custom_call.1} parent=79 // pred_fallthru
          _
      $region80: #{tpu_custom_call.1} parent=5 // pred_fallthru
        _
      %p590 = scmp.le.s32.totalorder 1, %s33
      %p591 = scmp.lt.s32.totalorder %s33, 3
      %p592 = pnand %p590, %p591
      %p593 = pneg %p592
      // Predicated region
      $region93: #{tpu_custom_call.1} parent=5 // pred_check
        _
      $region94: #{tpu_custom_call.1} parent=5 // pred_check_branch
        %595 = sbr.rel (%p592) target = $region96
      $region95: #{tpu_custom_call.1} parent=5 // pred_region
        %s596 = ssub.s32 %s33, 1
        %p597 = scmp.lt.s32.totalorder %s38, 1
        %s598 = scalar_select %p597, %s38, 1
        %s599 = smul.addr %s598, 3
        %s600 = smul.addr %s599, 4
        %s601 = scalar_lea.vmem %s0, %s600
        %p602 = pneg %p59
        %p603 = pneg %p56
        %p604 = scmp.lt.s32.totalorder %s38, 1
        %s605 = scalar_select %p604, %s38, 1
        %s606 = smul.addr %s605, 3
        %s607 = smul.addr %s606, 4
        %s608 = scalar_lea.vmem %s1, %s607
        %p609 = pneg %p85
        %p610 = pneg %p82
        %p611 = scmp.lt.s32.totalorder %s38, 1
        %s612 = scalar_select %p611, %s38, 1
        %s613 = smul.addr %s612, 16
        %s614 = smul.addr %s613, 8
        %s615 = scalar_lea.vmem %s2, %s614
        %p616 = pneg %p111
        %p617 = pneg %p108
        %p618 = pneg %p132
        %p619 = pneg %p129
        %p620 = pneg %p153
        %p621 = pneg %p150
        %p622 = pneg %p174
        %p623 = pneg %p171
        %p624 = pneg %p195
        %p625 = pneg %p192
        %p626 = pneg %p216
        %p627 = pneg %p213
        %p628 = pneg %p237
        %p629 = pneg %p234
        %p630 = pneg %p258
        %p631 = pneg %p255
        %p632 = pneg %p279
        %p633 = pneg %p276
        %p634 = pneg %p300
        %p635 = pneg %p297
        %p636 = pneg %p321
        %p637 = pneg %p318
        %p638 = pneg %p342
        %p639 = pneg %p339
        %p640 = pneg %p363
        %p641 = pneg %p360
        %p642 = pneg %p384
        %p643 = pneg %p381
        %p644 = pneg %p405
        %p645 = pneg %p402
        %p646 = pneg %p426
        %p647 = pneg %p423
        %p648 = pneg %p447
        %p649 = pneg %p444
        %p650 = pneg %p473
        %p651 = pneg %p470
        %s652 = sand.u32 %s460, 1
        %s653 = scalar_lea.sflag [#allocation3], %s652
        %s654 = sand.u32 %s460, 1
        %s655 = smul.addr %s654, 24
        %s656 = scalar_lea.vmem [#allocation2], %s655
        %p657 = pneg %p499
        %p658 = pneg %p496
        %s659 = sand.u32 %s486, 1
        %s660 = scalar_lea.sflag [#allocation5], %s659
        %s661 = sand.u32 %s486, 1
        %s662 = smul.addr %s661, 24
        %s663 = scalar_lea.vmem [#allocation4], %s662
        %p664 = scmp.lt.s32.totalorder %s38, 1
        %s665 = scalar_select %p664, %s38, 1
        %s666 = smul.addr %s665, 3
        %s667 = smul.addr %s666, 4
        %s668 = scalar_lea.vmem %s0, %s667
        %p669 = scmp.lt.s32.totalorder %s38, 1
        %s670 = scalar_select %p669, %s38, 1
        %s671 = smul.addr %s670, 3
        %s672 = smul.addr %s671, 4
        %s673 = scalar_lea.vmem %s1, %s672
        %p674 = scmp.lt.s32.totalorder %s38, 1
        %s675 = scalar_select %p674, %s38, 1
        %s676 = smul.addr %s675, 16
        %s677 = smul.addr %s676, 8
        %s678 = scalar_lea.vmem %s2, %s677
        %v680 = vld [vmem:[%s668] sm:$0xf]
        %v681 = vld [vmem:[%s668 + $0x4] sm:$0xf]
        %v682 = vld [vmem:[%s668 + $0x8] sm:$0xf]
        %v683 = vld [vmem:[%s3] sm:$0xf]
        %v684 = vld [vmem:[%s3 + $0x4] sm:$0xf]
        %v685 = vld [vmem:[%s3 + $0x8] sm:$0xf]
        %v686 = vld [vmem:[%s3 + $0xc] sm:$0xf]
        %v687 = vld [vmem:[%s4] sm:$0x1]
        %v689 = vperm.slane %v687, 0
        %v694 = vunpack.c.l.b16 %v680
        %v695 = vunpack.c.l.b16 %v681
        %v696 = vunpack.c.l.b16 %v682
        %v697 = vpack.c.b16 %v695, %v694
        %v698 = vpack.c.b16 %v696, %v696
        %v703 = vunpack.c.l.b16 %v683
        %v704 = vunpack.c.l.b16 %v684
        %v705 = vunpack.c.l.b16 %v685
        %v706 = vunpack.c.l.b16 %v686
        %v707 = vpack.c.b16 %v704, %v703
        %v708 = vpack.c.b16 %v706, %v705
        %vm711 = vcmask 261120
        %v713 = vsel %vm711, %v697, 0
        %v716 = vsel %vm711, %v698, 0
        %718 = vmatpush.bf16.msra.mxu0 0
        %719 = vmatpush.bf16.msra.mxu0 0
        %720 = vmatpush.bf16.msra.mxu0 0
        %721 = vmatpush.bf16.msra.mxu0 0
        %722 = vmatpush.bf16.msra.mxu0 0
        %723 = vmatpush.bf16.msra.mxu0 0
        %724 = vmatpush.bf16.msra.mxu0 %v708
        %725 = vmatpush.bf16.msra.mxu0 %v707
        %726 = vmatmul.bf16.gmra.mxu0 %v713
        %v727 = vpop.f32.mrf.mxu0
        %v728 = vadd.f32 %v689, %v727
        %v729 = vpop.f32.mrf.mxu0
        %v730 = vadd.f32 %v689, %v729
        %731 = vmatmul.bf16.gmra.mxu0 %v716
        %v732 = vpop.f32.mrf.mxu0
        %v733 = vadd.f32 %v689, %v732
        %v734 = vpop.f32.mrf.mxu0
        %735 = vdwg.mxu0
        %v736 = vld [vmem:[%s5] sm:$0xf]
        %v737 = vld [vmem:[%s5 + $0x4] sm:$0xf]
        %v738 = vld [vmem:[%s5 + $0x8] sm:$0xf]
        %v739 = vld [vmem:[%s5 + $0xc] sm:$0xf]
        %v740 = vld [vmem:[%s6] sm:$0x1]
        %v742 = vperm.slane %v740, 0
        %v748 = vunpack.c.l.b16 %v736
        %v749 = vunpack.c.l.b16 %v737
        %v750 = vunpack.c.l.b16 %v738
        %v751 = vunpack.c.l.b16 %v739
        %v752 = vpack.c.b16 %v749, %v748
        %v753 = vpack.c.b16 %v751, %v750
        %756 = vmatpush.bf16.msra.mxu0 0
        %757 = vmatpush.bf16.msra.mxu0 0
        %758 = vmatpush.bf16.msra.mxu0 0
        %759 = vmatpush.bf16.msra.mxu0 0
        %760 = vmatpush.bf16.msra.mxu0 0
        %761 = vmatpush.bf16.msra.mxu0 0
        %762 = vmatpush.bf16.msra.mxu0 %v753
        %763 = vmatpush.bf16.msra.mxu0 %v752
        %764 = vmatmul.bf16.gmra.mxu0 %v713
        %v765 = vpop.f32.mrf.mxu0
        %v766 = vadd.f32 %v742, %v765
        %v767 = vpop.f32.mrf.mxu0
        %v768 = vadd.f32 %v742, %v767
        %769 = vmatmul.bf16.gmra.mxu0 %v716
        %v770 = vpop.f32.mrf.mxu0
        %v771 = vadd.f32 %v742, %v770
        %v772 = vpop.f32.mrf.mxu0
        %773 = vdwg.mxu0
        %v774 = vmax.f32 %v766, 0.0
        %v775 = vmax.f32 %v768, 0.0
        %v776 = vmax.f32 %v771, 0.0
        %v777 = vpack.c.bf16 %v775, %v774
        %v778 = vpack.c.bf16 %v776, %v776
        %v779 = vld [vmem:[%s7] sm:$0xf]
        %v780 = vld [vmem:[%s7 + $0x4] sm:$0xf]
        %v781 = vld [vmem:[%s7 + $0x8] sm:$0xf]
        %v782 = vld [vmem:[%s7 + $0xc] sm:$0xf]
        %v783 = vld [vmem:[%s8] sm:$0x1]
        %v785 = vperm.slane %v783, 0
        %v791 = vunpack.c.l.b16 %v779
        %v792 = vunpack.c.l.b16 %v780
        %v793 = vunpack.c.l.b16 %v781
        %v794 = vunpack.c.l.b16 %v782
        %v795 = vpack.c.b16 %v792, %v791
        %v796 = vpack.c.b16 %v794, %v793
        %v800 = vsel %vm711, %v777, 0
        %v803 = vsel %vm711, %v778, 0
        %805 = vmatpush.bf16.msra.mxu0 0
        %806 = vmatpush.bf16.msra.mxu0 0
        %807 = vmatpush.bf16.msra.mxu0 0
        %808 = vmatpush.bf16.msra.mxu0 0
        %809 = vmatpush.bf16.msra.mxu0 0
        %810 = vmatpush.bf16.msra.mxu0 0
        %811 = vmatpush.bf16.msra.mxu0 %v796
        %812 = vmatpush.bf16.msra.mxu0 %v795
        %813 = vmatmul.bf16.gmra.mxu0 %v800
        %v814 = vpop.f32.mrf.mxu0
        %v815 = vadd.f32 %v785, %v814
        %v816 = vpop.f32.mrf.mxu0
        %v817 = vadd.f32 %v785, %v816
        %818 = vmatmul.bf16.gmra.mxu0 %v803
        %v819 = vpop.f32.mrf.mxu0
        %v820 = vadd.f32 %v785, %v819
        %v821 = vpop.f32.mrf.mxu0
        %822 = vdwg.mxu0
        %v823 = vmax.f32 %v815, 0.0
        %v824 = vmax.f32 %v817, 0.0
        %v825 = vmax.f32 %v820, 0.0
        %v826 = vpack.c.bf16 %v824, %v823
        %v827 = vpack.c.bf16 %v825, %v825
        %v828 = vld [vmem:[%s9] sm:$0xf]
        %v829 = vld [vmem:[%s9 + $0x4] sm:$0xf]
        %v830 = vld [vmem:[%s9 + $0x8] sm:$0xf]
        %v831 = vld [vmem:[%s9 + $0xc] sm:$0xf]
        %v832 = vld [vmem:[%s10] sm:$0x1]
        %v834 = vperm.slane %v832, 0
        %v840 = vunpack.c.l.b16 %v828
        %v841 = vunpack.c.l.b16 %v829
        %v842 = vunpack.c.l.b16 %v830
        %v843 = vunpack.c.l.b16 %v831
        %v844 = vpack.c.b16 %v841, %v840
        %v845 = vpack.c.b16 %v843, %v842
        %v849 = vsel %vm711, %v826, 0
        %v852 = vsel %vm711, %v827, 0
        %854 = vmatpush.bf16.msra.mxu0 0
        %855 = vmatpush.bf16.msra.mxu0 0
        %856 = vmatpush.bf16.msra.mxu0 0
        %857 = vmatpush.bf16.msra.mxu0 0
        %858 = vmatpush.bf16.msra.mxu0 0
        %859 = vmatpush.bf16.msra.mxu0 0
        %860 = vmatpush.bf16.msra.mxu0 %v845
        %861 = vmatpush.bf16.msra.mxu0 %v844
        %862 = vmatmul.bf16.gmra.mxu0 %v849
        %v863 = vpop.f32.mrf.mxu0
        %v864 = vadd.f32 %v834, %v863
        %v865 = vpop.f32.mrf.mxu0
        %v866 = vadd.f32 %v834, %v865
        %867 = vmatmul.bf16.gmra.mxu0 %v852
        %v868 = vpop.f32.mrf.mxu0
        %v869 = vadd.f32 %v834, %v868
        %v870 = vpop.f32.mrf.mxu0
        %871 = vdwg.mxu0
        %v872 = vlaneseq
        %v873 = vand.u32 %v872, 127
        %vm874 = vcmp.ge.s32.totalorder %v873, 6
        %vm875 = vcmp.lt.s32.totalorder %v873, 10
        %vm876 = vmand %vm874, %vm875
        %v877 = vxor.u32 %v864, 2147483648
        %v878 = vxor.u32 %v866, 2147483648
        %v879 = vxor.u32 %v869, 2147483648
        %v880 = vmul.f32 %v877, 1.442695
        %v881 = vpow.pop %v880
        %v882 = vmul.f32 %v878, 1.442695
        %v883 = vpow.pop %v882
        %v884 = vmul.f32 %v879, 1.442695
        %v885 = vpow.pop %v884
        %v886 = vadd.f32 %v881, 1.0
        %v887 = vadd.f32 %v883, 1.0
        %v888 = vadd.f32 %v885, 1.0
        %v889 = vrcp.pop %v886
        %v890 = vmul.f32 %v886, %v889
        %v891 = vsub.f32 1.0, %v890
        %v892 = vmul.f32 %v889, %v891
        %v893 = vadd.f32 %v889, %v892
        %vm894 = vweird.f32 %v886
        %vm895 = vweird.f32 %v889
        %vm896 = vmor %vm894, %vm895
        %v897 = vsel %vm896, %v889, %v893
        %v898 = vand.u32 2147483647, %v886
        %vm899 = vcmp.eq.f32.partialorder %v898, 8.507059e+37
        %v900 = vand.u32 %v886, 2147483648
        %v901 = vor.u32 1.1754944e-38, %v900
        %v902 = vsel %vm899, %v901, %v897
        %v903 = vmul.f32 1.0, %v902
        %v904 = vrcp.pop %v887
        %v905 = vmul.f32 %v887, %v904
        %v906 = vsub.f32 1.0, %v905
        %v907 = vmul.f32 %v904, %v906
        %v908 = vadd.f32 %v904, %v907
        %vm909 = vweird.f32 %v887
        %vm910 = vweird.f32 %v904
        %vm911 = vmor %vm909, %vm910
        %v912 = vsel %vm911, %v904, %v908
        %v913 = vand.u32 2147483647, %v887
        %vm914 = vcmp.eq.f32.partialorder %v913, 8.507059e+37
        %v915 = vand.u32 %v887, 2147483648
        %v916 = vor.u32 1.1754944e-38, %v915
        %v917 = vsel %vm914, %v916, %v912
        %v918 = vmul.f32 1.0, %v917
        %v919 = vrcp.pop %v888
        %v920 = vmul.f32 %v888, %v919
        %v921 = vsub.f32 1.0, %v920
        %v922 = vmul.f32 %v919, %v921
        %v923 = vadd.f32 %v919, %v922
        %vm924 = vweird.f32 %v888
        %vm925 = vweird.f32 %v919
        %vm926 = vmor %vm924, %vm925
        %v927 = vsel %vm926, %v919, %v923
        %v928 = vand.u32 2147483647, %v888
        %vm929 = vcmp.eq.f32.partialorder %v928, 8.507059e+37
        %v930 = vand.u32 %v888, 2147483648
        %v931 = vor.u32 1.1754944e-38, %v930
        %v932 = vsel %vm929, %v931, %v927
        %v933 = vmul.f32 1.0, %v932
        %v934 = vsel %vm876, %v903, %v728
        %v935 = vsel %vm876, %v918, %v730
        %v936 = vsel %vm876, %v933, %v733
        %937 = vst [vmem:[%s656] sm:$0xff] %v934
        %938 = vst [vmem:[%s656 + $0x8] sm:$0xff] %v935
        %939 = vst [vmem:[%s656 + $0x10] sm:$0xff] %v936
        %v940 = vld [vmem:[%s673] sm:$0xf]
        %v941 = vld [vmem:[%s673 + $0x4] sm:$0xf]
        %v942 = vld [vmem:[%s673 + $0x8] sm:$0xf]
        %v943 = vld [vmem:[%s17] sm:$0xf]
        %v944 = vld [vmem:[%s17 + $0x4] sm:$0xf]
        %v945 = vld [vmem:[%s17 + $0x8] sm:$0xf]
        %v946 = vld [vmem:[%s17 + $0xc] sm:$0xf]
        %v947 = vld [vmem:[%s18] sm:$0x1]
        %v949 = vperm.slane %v947, 0
        %v954 = vunpack.c.l.b16 %v940
        %v955 = vunpack.c.l.b16 %v941
        %v956 = vunpack.c.l.b16 %v942
        %v957 = vpack.c.b16 %v955, %v954
        %v958 = vpack.c.b16 %v956, %v956
        %v963 = vunpack.c.l.b16 %v943
        %v964 = vunpack.c.l.b16 %v944
        %v965 = vunpack.c.l.b16 %v945
        %v966 = vunpack.c.l.b16 %v946
        %v967 = vpack.c.b16 %v964, %v963
        %v968 = vpack.c.b16 %v966, %v965
        %v972 = vsel %vm711, %v957, 0
        %v975 = vsel %vm711, %v958, 0
        %977 = vmatpush.bf16.msra.mxu0 0
        %978 = vmatpush.bf16.msra.mxu0 0
        %979 = vmatpush.bf16.msra.mxu0 0
        %980 = vmatpush.bf16.msra.mxu0 0
        %981 = vmatpush.bf16.msra.mxu0 0
        %982 = vmatpush.bf16.msra.mxu0 0
        %983 = vmatpush.bf16.msra.mxu0 %v968
        %984 = vmatpush.bf16.msra.mxu0 %v967
        %985 = vmatmul.bf16.gmra.mxu0 %v972
        %v986 = vpop.f32.mrf.mxu0
        %v987 = vadd.f32 %v949, %v986
        %v988 = vpop.f32.mrf.mxu0
        %v989 = vadd.f32 %v949, %v988
        %990 = vmatmul.bf16.gmra.mxu0 %v975
        %v991 = vpop.f32.mrf.mxu0
        %v992 = vadd.f32 %v949, %v991
        %v993 = vpop.f32.mrf.mxu0
        %994 = vdwg.mxu0
        %v995 = vld [vmem:[%s11] sm:$0xf]
        %v996 = vld [vmem:[%s11 + $0x4] sm:$0xf]
        %v997 = vld [vmem:[%s11 + $0x8] sm:$0xf]
        %v998 = vld [vmem:[%s11 + $0xc] sm:$0xf]
        %v999 = vld [vmem:[%s12] sm:$0x1]
        %v1001 = vperm.slane %v999, 0
        %v1007 = vunpack.c.l.b16 %v995
        %v1008 = vunpack.c.l.b16 %v996
        %v1009 = vunpack.c.l.b16 %v997
        %v1010 = vunpack.c.l.b16 %v998
        %v1011 = vpack.c.b16 %v1008, %v1007
        %v1012 = vpack.c.b16 %v1010, %v1009
        %1015 = vmatpush.bf16.msra.mxu0 0
        %1016 = vmatpush.bf16.msra.mxu0 0
        %1017 = vmatpush.bf16.msra.mxu0 0
        %1018 = vmatpush.bf16.msra.mxu0 0
        %1019 = vmatpush.bf16.msra.mxu0 0
        %1020 = vmatpush.bf16.msra.mxu0 0
        %1021 = vmatpush.bf16.msra.mxu0 %v1012
        %1022 = vmatpush.bf16.msra.mxu0 %v1011
        %1023 = vmatmul.bf16.gmra.mxu0 %v972
        %v1024 = vpop.f32.mrf.mxu0
        %v1025 = vadd.f32 %v1001, %v1024
        %v1026 = vpop.f32.mrf.mxu0
        %v1027 = vadd.f32 %v1001, %v1026
        %1028 = vmatmul.bf16.gmra.mxu0 %v975
        %v1029 = vpop.f32.mrf.mxu0
        %v1030 = vadd.f32 %v1001, %v1029
        %v1031 = vpop.f32.mrf.mxu0
        %1032 = vdwg.mxu0
        %v1033 = vmax.f32 %v1025, 0.0
        %v1034 = vmax.f32 %v1027, 0.0
        %v1035 = vmax.f32 %v1030, 0.0
        %v1036 = vpack.c.bf16 %v1034, %v1033
        %v1037 = vpack.c.bf16 %v1035, %v1035
        %v1038 = vld [vmem:[%s13] sm:$0xf]
        %v1039 = vld [vmem:[%s13 + $0x4] sm:$0xf]
        %v1040 = vld [vmem:[%s13 + $0x8] sm:$0xf]
        %v1041 = vld [vmem:[%s13 + $0xc] sm:$0xf]
        %v1042 = vld [vmem:[%s13 + $0x10] sm:$0xf]
        %v1043 = vld [vmem:[%s13 + $0x14] sm:$0xf]
        %v1044 = vld [vmem:[%s13 + $0x18] sm:$0xf]
        %v1045 = vld [vmem:[%s13 + $0x1c] sm:$0xf]
        %v1046 = vld [vmem:[%s14] sm:$0x1]
        %v1048 = vperm.slane %v1046, 0
        %v1058 = vunpack.c.l.b16 %v1038
        %v1059 = vunpack.c.l.b16 %v1039
        %v1060 = vunpack.c.l.b16 %v1040
        %v1061 = vunpack.c.l.b16 %v1041
        %v1062 = vunpack.c.l.b16 %v1042
        %v1063 = vunpack.c.l.b16 %v1043
        %v1064 = vunpack.c.l.b16 %v1044
        %v1065 = vunpack.c.l.b16 %v1045
        %v1066 = vpack.c.b16 %v1059, %v1058
        %v1067 = vpack.c.b16 %v1061, %v1060
        %v1068 = vpack.c.b16 %v1063, %v1062
        %v1069 = vpack.c.b16 %v1065, %v1064
        %vm1074 = vcmask 523264
        %v1076 = vsel %vm1074, %v1036, 0
        %v1079 = vsel %vm1074, %v1037, 0
        %1081 = vmatpush.bf16.msra.mxu0 0
        %1082 = vmatpush.bf16.msra.mxu0 0
        %1083 = vmatpush.bf16.msra.mxu0 0
        %1084 = vmatpush.bf16.msra.mxu0 0
        %1085 = vmatpush.bf16.msra.mxu0 %v1069
        %1086 = vmatpush.bf16.msra.mxu0 %v1068
        %1087 = vmatpush.bf16.msra.mxu0 %v1067
        %1088 = vmatpush.bf16.msra.mxu0 %v1066
        %1089 = vmatmul.bf16.gmra.mxu0 %v1076
        %v1090 = vpop.f32.mrf.mxu0
        %v1091 = vadd.f32 %v1048, %v1090
        %v1092 = vpop.f32.mrf.mxu0
        %v1093 = vadd.f32 %v1048, %v1092
        %1094 = vmatmul.bf16.gmra.mxu0 %v1079
        %v1095 = vpop.f32.mrf.mxu0
        %v1096 = vadd.f32 %v1048, %v1095
        %v1097 = vpop.f32.mrf.mxu0
        %1098 = vdwg.mxu0
        %v1099 = vmax.f32 %v1091, 0.0
        %v1100 = vmax.f32 %v1093, 0.0
        %v1101 = vmax.f32 %v1096, 0.0
        %v1102 = vpack.c.bf16 %v1100, %v1099
        %v1103 = vpack.c.bf16 %v1101, %v1101
        %v1104 = vld [vmem:[%s15] sm:$0xf]
        %v1105 = vld [vmem:[%s15 + $0x4] sm:$0xf]
        %v1106 = vld [vmem:[%s15 + $0x8] sm:$0xf]
        %v1107 = vld [vmem:[%s15 + $0xc] sm:$0xf]
        %v1108 = vld [vmem:[%s15 + $0x10] sm:$0xf]
        %v1109 = vld [vmem:[%s15 + $0x14] sm:$0xf]
        %v1110 = vld [vmem:[%s15 + $0x18] sm:$0xf]
        %v1111 = vld [vmem:[%s15 + $0x1c] sm:$0xf]
        %v1112 = vld [vmem:[%s16] sm:$0x1]
        %v1114 = vperm.slane %v1112, 0
        %v1124 = vunpack.c.l.b16 %v1104
        %v1125 = vunpack.c.l.b16 %v1105
        %v1126 = vunpack.c.l.b16 %v1106
        %v1127 = vunpack.c.l.b16 %v1107
        %v1128 = vunpack.c.l.b16 %v1108
        %v1129 = vunpack.c.l.b16 %v1109
        %v1130 = vunpack.c.l.b16 %v1110
        %v1131 = vunpack.c.l.b16 %v1111
        %v1132 = vpack.c.b16 %v1125, %v1124
        %v1133 = vpack.c.b16 %v1127, %v1126
        %v1134 = vpack.c.b16 %v1129, %v1128
        %v1135 = vpack.c.b16 %v1131, %v1130
        %v1141 = vsel %vm1074, %v1102, 0
        %v1144 = vsel %vm1074, %v1103, 0
        %1146 = vmatpush.bf16.msra.mxu0 0
        %1147 = vmatpush.bf16.msra.mxu0 0
        %1148 = vmatpush.bf16.msra.mxu0 0
        %1149 = vmatpush.bf16.msra.mxu0 0
        %1150 = vmatpush.bf16.msra.mxu0 %v1135
        %1151 = vmatpush.bf16.msra.mxu0 %v1134
        %1152 = vmatpush.bf16.msra.mxu0 %v1133
        %1153 = vmatpush.bf16.msra.mxu0 %v1132
        %1154 = vmatmul.bf16.gmra.mxu0 %v1141
        %v1155 = vpop.f32.mrf.mxu0
        %v1156 = vadd.f32 %v1114, %v1155
        %v1157 = vpop.f32.mrf.mxu0
        %v1158 = vadd.f32 %v1114, %v1157
        %1159 = vmatmul.bf16.gmra.mxu0 %v1144
        %v1160 = vpop.f32.mrf.mxu0
        %v1161 = vadd.f32 %v1114, %v1160
        %v1162 = vpop.f32.mrf.mxu0
        %1163 = vdwg.mxu0
        %vm1164 = vcmp.lt.s32.totalorder %v873, 32
        %v1165 = vmul.f32 %v1156, %v1156
        %v1166 = vmul.f32 %v1158, %v1158
        %v1167 = vmul.f32 %v1161, %v1161
        %v1168 = vsel %vm1164, %v1165, 0.0
        %v1169 = vsel %vm1164, %v1166, 0.0
        %v1170 = vsel %vm1164, %v1167, 0.0
        %v1171 = vsel %vm1074, %v1168, 0.0
        %1172 = vadd.xlane.f32.xlu0 %v1171
        %v1173 = vpop.xlane.xlu0 %1172
        %v1174 = vsel %vm1074, %v1169, 0.0
        %1175 = vadd.xlane.f32.xlu0 %v1174
        %v1176 = vpop.xlane.xlu0 %1175
        %v1177 = vsel %vm1074, %v1170, 0.0
        %1178 = vadd.xlane.f32.xlu0 %v1177
        %v1179 = vpop.xlane.xlu0 %1178
        %v1180 = vsel %vm1164, 0.0, %v1165
        %v1181 = vsel %vm1164, 0.0, %v1166
        %v1182 = vsel %vm1164, 0.0, %v1167
        %v1183 = vsel %vm1074, %v1180, 0.0
        %1184 = vadd.xlane.f32.xlu0 %v1183
        %v1185 = vpop.xlane.xlu0 %1184
        %v1186 = vsel %vm1074, %v1181, 0.0
        %1187 = vadd.xlane.f32.xlu0 %v1186
        %v1188 = vpop.xlane.xlu0 %1187
        %v1189 = vsel %vm1074, %v1182, 0.0
        %1190 = vadd.xlane.f32.xlu0 %v1189
        %v1191 = vpop.xlane.xlu0 %1190
        %v1192 = vmax.f32 %v1173, 1e-24
        %v1193 = vmax.f32 %v1176, 1e-24
        %v1194 = vmax.f32 %v1179, 1e-24
        %v1195 = vrsqrt.pop %v1192
        %v1196 = vmul.f32 %v1195, %v1192
        %v1197 = vmul.f32 %v1196, %v1195
        %v1198 = vmul.f32 0.5, %v1197
        %v1199 = vsub.f32 1.5, %v1198
        %v1200 = vmul.f32 %v1195, %v1199
        %vm1201 = vweird.f32 %v1192
        %vm1202 = vweird.f32 %v1195
        %vm1203 = vmor %vm1201, %vm1202
        %v1204 = vsel %vm1203, %v1195, %v1200
        %v1205 = vrsqrt.pop %v1193
        %v1206 = vmul.f32 %v1205, %v1193
        %v1207 = vmul.f32 %v1206, %v1205
        %v1208 = vmul.f32 0.5, %v1207
        %v1209 = vsub.f32 1.5, %v1208
        %v1210 = vmul.f32 %v1205, %v1209
        %vm1211 = vweird.f32 %v1193
        %vm1212 = vweird.f32 %v1205
        %vm1213 = vmor %vm1211, %vm1212
        %v1214 = vsel %vm1213, %v1205, %v1210
        %v1215 = vrsqrt.pop %v1194
        %v1216 = vmul.f32 %v1215, %v1194
        %v1217 = vmul.f32 %v1216, %v1215
        %v1218 = vmul.f32 0.5, %v1217
        %v1219 = vsub.f32 1.5, %v1218
        %v1220 = vmul.f32 %v1215, %v1219
        %vm1221 = vweird.f32 %v1194
        %vm1222 = vweird.f32 %v1215
        %vm1223 = vmor %vm1221, %vm1222
        %v1224 = vsel %vm1223, %v1215, %v1220
        %v1225 = vmax.f32 %v1185, 1e-24
        %v1226 = vmax.f32 %v1188, 1e-24
        %v1227 = vmax.f32 %v1191, 1e-24
        %v1228 = vrsqrt.pop %v1225
        %v1229 = vmul.f32 %v1228, %v1225
        %v1230 = vmul.f32 %v1229, %v1228
        %v1231 = vmul.f32 0.5, %v1230
        %v1232 = vsub.f32 1.5, %v1231
        %v1233 = vmul.f32 %v1228, %v1232
        %vm1234 = vweird.f32 %v1225
        %vm1235 = vweird.f32 %v1228
        %vm1236 = vmor %vm1234, %vm1235
        %v1237 = vsel %vm1236, %v1228, %v1233
        %v1238 = vrsqrt.pop %v1226
        %v1239 = vmul.f32 %v1238, %v1226
        %v1240 = vmul.f32 %v1239, %v1238
        %v1241 = vmul.f32 0.5, %v1240
        %v1242 = vsub.f32 1.5, %v1241
        %v1243 = vmul.f32 %v1238, %v1242
        %vm1244 = vweird.f32 %v1226
        %vm1245 = vweird.f32 %v1238
        %vm1246 = vmor %vm1244, %vm1245
        %v1247 = vsel %vm1246, %v1238, %v1243
        %v1248 = vrsqrt.pop %v1227
        %v1249 = vmul.f32 %v1248, %v1227
        %v1250 = vmul.f32 %v1249, %v1248
        %v1251 = vmul.f32 0.5, %v1250
        %v1252 = vsub.f32 1.5, %v1251
        %v1253 = vmul.f32 %v1248, %v1252
        %vm1254 = vweird.f32 %v1227
        %vm1255 = vweird.f32 %v1248
        %vm1256 = vmor %vm1254, %vm1255
        %v1257 = vsel %vm1256, %v1248, %v1253
        %v1258 = vsel %vm1164, %v1204, %v1237
        %v1259 = vsel %vm1164, %v1214, %v1247
        %v1260 = vsel %vm1164, %v1224, %v1257
        %v1261 = vmul.f32 %v1156, %v1258
        %v1262 = vmul.f32 %v1158, %v1259
        %v1263 = vmul.f32 %v1161, %v1260
        %v1264 = vpack.c.bf16 %v1262, %v1261
        %v1265 = vpack.c.bf16 %v1263, %v1263
        %v1266 = vld [vmem:[%s678] sm:$0xff]
        %v1267 = vld [vmem:[%s678 + $0x8] sm:$0xff]
        %v1268 = vld [vmem:[%s678 + $0x10] sm:$0xff]
        %v1269 = vld [vmem:[%s678 + $0x18] sm:$0xff]
        %v1270 = vld [vmem:[%s678 + $0x20] sm:$0xff]
        %v1271 = vld [vmem:[%s678 + $0x28] sm:$0xff]
        %v1272 = vld [vmem:[%s678 + $0x30] sm:$0xff]
        %v1273 = vld [vmem:[%s678 + $0x38] sm:$0xff]
        %v1274 = vld [vmem:[%s678 + $0x40] sm:$0xff]
        %v1275 = vld [vmem:[%s678 + $0x48] sm:$0xff]
        %v1276 = vld [vmem:[%s678 + $0x50] sm:$0xff]
        %v1277 = vld [vmem:[%s678 + $0x58] sm:$0xff]
        %v1278 = vld [vmem:[%s678 + $0x60] sm:$0xff]
        %v1279 = vld [vmem:[%s678 + $0x68] sm:$0xff]
        %v1280 = vld [vmem:[%s678 + $0x70] sm:$0xff]
        %v1281 = vld [vmem:[%s678 + $0x78] sm:$0xff]
        %v1282 = vmul.f32 %v1266, %v1266
        %v1283 = vmul.f32 %v1267, %v1267
        %v1284 = vmul.f32 %v1268, %v1268
        %v1285 = vmul.f32 %v1269, %v1269
        %v1286 = vmul.f32 %v1270, %v1270
        %v1287 = vmul.f32 %v1271, %v1271
        %v1288 = vmul.f32 %v1272, %v1272
        %v1289 = vmul.f32 %v1273, %v1273
        %v1290 = vmul.f32 %v1274, %v1274
        %v1291 = vmul.f32 %v1275, %v1275
        %v1292 = vmul.f32 %v1276, %v1276
        %v1293 = vmul.f32 %v1277, %v1277
        %v1294 = vmul.f32 %v1278, %v1278
        %v1295 = vmul.f32 %v1279, %v1279
        %v1296 = vmul.f32 %v1280, %v1280
        %v1297 = vmul.f32 %v1281, %v1281
        %v1298 = vsel %vm1074, %v1282, 0.0
        %1299 = vadd.xlane.f32.xlu0 %v1298
        %v1300 = vpop.xlane.xlu0 %1299
        %v1301 = vsel %vm1074, %v1283, 0.0
        %1302 = vadd.xlane.f32.xlu0 %v1301
        %v1303 = vpop.xlane.xlu0 %1302
        %v1304 = vsel %vm1074, %v1284, 0.0
        %1305 = vadd.xlane.f32.xlu0 %v1304
        %v1306 = vpop.xlane.xlu0 %1305
        %v1307 = vsel %vm1074, %v1285, 0.0
        %1308 = vadd.xlane.f32.xlu0 %v1307
        %v1309 = vpop.xlane.xlu0 %1308
        %v1310 = vsel %vm1074, %v1286, 0.0
        %1311 = vadd.xlane.f32.xlu0 %v1310
        %v1312 = vpop.xlane.xlu0 %1311
        %v1313 = vsel %vm1074, %v1287, 0.0
        %1314 = vadd.xlane.f32.xlu0 %v1313
        %v1315 = vpop.xlane.xlu0 %1314
        %v1316 = vsel %vm1074, %v1288, 0.0
        %1317 = vadd.xlane.f32.xlu0 %v1316
        %v1318 = vpop.xlane.xlu0 %1317
        %v1319 = vsel %vm1074, %v1289, 0.0
        %1320 = vadd.xlane.f32.xlu0 %v1319
        %v1321 = vpop.xlane.xlu0 %1320
        %v1322 = vsel %vm1074, %v1290, 0.0
        %1323 = vadd.xlane.f32.xlu0 %v1322
        %v1324 = vpop.xlane.xlu0 %1323
        %v1325 = vsel %vm1074, %v1291, 0.0
        %1326 = vadd.xlane.f32.xlu0 %v1325
        %v1327 = vpop.xlane.xlu0 %1326
        %v1328 = vsel %vm1074, %v1292, 0.0
        %1329 = vadd.xlane.f32.xlu0 %v1328
        %v1330 = vpop.xlane.xlu0 %1329
        %v1331 = vsel %vm1074, %v1293, 0.0
        %1332 = vadd.xlane.f32.xlu0 %v1331
        %v1333 = vpop.xlane.xlu0 %1332
        %v1334 = vsel %vm1074, %v1294, 0.0
        %1335 = vadd.xlane.f32.xlu0 %v1334
        %v1336 = vpop.xlane.xlu0 %1335
        %v1337 = vsel %vm1074, %v1295, 0.0
        %1338 = vadd.xlane.f32.xlu0 %v1337
        %v1339 = vpop.xlane.xlu0 %1338
        %v1340 = vsel %vm1074, %v1296, 0.0
        %1341 = vadd.xlane.f32.xlu0 %v1340
        %v1342 = vpop.xlane.xlu0 %1341
        %v1343 = vsel %vm1074, %v1297, 0.0
        %1344 = vadd.xlane.f32.xlu0 %v1343
        %v1345 = vpop.xlane.xlu0 %1344
        %v1346 = vmax.f32 %v1300, 1e-24
        %v1347 = vmax.f32 %v1303, 1e-24
        %v1348 = vmax.f32 %v1306, 1e-24
        %v1349 = vmax.f32 %v1309, 1e-24
        %v1350 = vmax.f32 %v1312, 1e-24
        %v1351 = vmax.f32 %v1315, 1e-24
        %v1352 = vmax.f32 %v1318, 1e-24
        %v1353 = vmax.f32 %v1321, 1e-24
        %v1354 = vmax.f32 %v1324, 1e-24
        %v1355 = vmax.f32 %v1327, 1e-24
        %v1356 = vmax.f32 %v1330, 1e-24
        %v1357 = vmax.f32 %v1333, 1e-24
        %v1358 = vmax.f32 %v1336, 1e-24
        %v1359 = vmax.f32 %v1339, 1e-24
        %v1360 = vmax.f32 %v1342, 1e-24
        %v1361 = vmax.f32 %v1345, 1e-24
        %v1362 = vrsqrt.pop %v1346
        %v1363 = vmul.f32 %v1362, %v1346
        %v1364 = vmul.f32 %v1363, %v1362
        %v1365 = vmul.f32 0.5, %v1364
        %v1366 = vsub.f32 1.5, %v1365
        %v1367 = vmul.f32 %v1362, %v1366
        %vm1368 = vweird.f32 %v1346
        %vm1369 = vweird.f32 %v1362
        %vm1370 = vmor %vm1368, %vm1369
        %v1371 = vsel %vm1370, %v1362, %v1367
        %v1372 = vrsqrt.pop %v1347
        %v1373 = vmul.f32 %v1372, %v1347
        %v1374 = vmul.f32 %v1373, %v1372
        %v1375 = vmul.f32 0.5, %v1374
        %v1376 = vsub.f32 1.5, %v1375
        %v1377 = vmul.f32 %v1372, %v1376
        %vm1378 = vweird.f32 %v1347
        %vm1379 = vweird.f32 %v1372
        %vm1380 = vmor %vm1378, %vm1379
        %v1381 = vsel %vm1380, %v1372, %v1377
        %v1382 = vrsqrt.pop %v1348
        %v1383 = vmul.f32 %v1382, %v1348
        %v1384 = vmul.f32 %v1383, %v1382
        %v1385 = vmul.f32 0.5, %v1384
        %v1386 = vsub.f32 1.5, %v1385
        %v1387 = vmul.f32 %v1382, %v1386
        %vm1388 = vweird.f32 %v1348
        %vm1389 = vweird.f32 %v1382
        %vm1390 = vmor %vm1388, %vm1389
        %v1391 = vsel %vm1390, %v1382, %v1387
        %v1392 = vrsqrt.pop %v1349
        %v1393 = vmul.f32 %v1392, %v1349
        %v1394 = vmul.f32 %v1393, %v1392
        %v1395 = vmul.f32 0.5, %v1394
        %v1396 = vsub.f32 1.5, %v1395
        %v1397 = vmul.f32 %v1392, %v1396
        %vm1398 = vweird.f32 %v1349
        %vm1399 = vweird.f32 %v1392
        %vm1400 = vmor %vm1398, %vm1399
        %v1401 = vsel %vm1400, %v1392, %v1397
        %v1402 = vrsqrt.pop %v1350
        %v1403 = vmul.f32 %v1402, %v1350
        %v1404 = vmul.f32 %v1403, %v1402
        %v1405 = vmul.f32 0.5, %v1404
        %v1406 = vsub.f32 1.5, %v1405
        %v1407 = vmul.f32 %v1402, %v1406
        %vm1408 = vweird.f32 %v1350
        %vm1409 = vweird.f32 %v1402
        %vm1410 = vmor %vm1408, %vm1409
        %v1411 = vsel %vm1410, %v1402, %v1407
        %v1412 = vrsqrt.pop %v1351
        %v1413 = vmul.f32 %v1412, %v1351
        %v1414 = vmul.f32 %v1413, %v1412
        %v1415 = vmul.f32 0.5, %v1414
        %v1416 = vsub.f32 1.5, %v1415
        %v1417 = vmul.f32 %v1412, %v1416
        %vm1418 = vweird.f32 %v1351
        %vm1419 = vweird.f32 %v1412
        %vm1420 = vmor %vm1418, %vm1419
        %v1421 = vsel %vm1420, %v1412, %v1417
        %v1422 = vrsqrt.pop %v1352
        %v1423 = vmul.f32 %v1422, %v1352
        %v1424 = vmul.f32 %v1423, %v1422
        %v1425 = vmul.f32 0.5, %v1424
        %v1426 = vsub.f32 1.5, %v1425
        %v1427 = vmul.f32 %v1422, %v1426
        %vm1428 = vweird.f32 %v1352
        %vm1429 = vweird.f32 %v1422
        %vm1430 = vmor %vm1428, %vm1429
        %v1431 = vsel %vm1430, %v1422, %v1427
        %v1432 = vrsqrt.pop %v1353
        %v1433 = vmul.f32 %v1432, %v1353
        %v1434 = vmul.f32 %v1433, %v1432
        %v1435 = vmul.f32 0.5, %v1434
        %v1436 = vsub.f32 1.5, %v1435
        %v1437 = vmul.f32 %v1432, %v1436
        %vm1438 = vweird.f32 %v1353
        %vm1439 = vweird.f32 %v1432
        %vm1440 = vmor %vm1438, %vm1439
        %v1441 = vsel %vm1440, %v1432, %v1437
        %v1442 = vrsqrt.pop %v1354
        %v1443 = vmul.f32 %v1442, %v1354
        %v1444 = vmul.f32 %v1443, %v1442
        %v1445 = vmul.f32 0.5, %v1444
        %v1446 = vsub.f32 1.5, %v1445
        %v1447 = vmul.f32 %v1442, %v1446
        %vm1448 = vweird.f32 %v1354
        %vm1449 = vweird.f32 %v1442
        %vm1450 = vmor %vm1448, %vm1449
        %v1451 = vsel %vm1450, %v1442, %v1447
        %v1452 = vrsqrt.pop %v1355
        %v1453 = vmul.f32 %v1452, %v1355
        %v1454 = vmul.f32 %v1453, %v1452
        %v1455 = vmul.f32 0.5, %v1454
        %v1456 = vsub.f32 1.5, %v1455
        %v1457 = vmul.f32 %v1452, %v1456
        %vm1458 = vweird.f32 %v1355
        %vm1459 = vweird.f32 %v1452
        %vm1460 = vmor %vm1458, %vm1459
        %v1461 = vsel %vm1460, %v1452, %v1457
        %v1462 = vrsqrt.pop %v1356
        %v1463 = vmul.f32 %v1462, %v1356
        %v1464 = vmul.f32 %v1463, %v1462
        %v1465 = vmul.f32 0.5, %v1464
        %v1466 = vsub.f32 1.5, %v1465
        %v1467 = vmul.f32 %v1462, %v1466
        %vm1468 = vweird.f32 %v1356
        %vm1469 = vweird.f32 %v1462
        %vm1470 = vmor %vm1468, %vm1469
        %v1471 = vsel %vm1470, %v1462, %v1467
        %v1472 = vrsqrt.pop %v1357
        %v1473 = vmul.f32 %v1472, %v1357
        %v1474 = vmul.f32 %v1473, %v1472
        %v1475 = vmul.f32 0.5, %v1474
        %v1476 = vsub.f32 1.5, %v1475
        %v1477 = vmul.f32 %v1472, %v1476
        %vm1478 = vweird.f32 %v1357
        %vm1479 = vweird.f32 %v1472
        %vm1480 = vmor %vm1478, %vm1479
        %v1481 = vsel %vm1480, %v1472, %v1477
        %v1482 = vrsqrt.pop %v1358
        %v1483 = vmul.f32 %v1482, %v1358
        %v1484 = vmul.f32 %v1483, %v1482
        %v1485 = vmul.f32 0.5, %v1484
        %v1486 = vsub.f32 1.5, %v1485
        %v1487 = vmul.f32 %v1482, %v1486
        %vm1488 = vweird.f32 %v1358
        %vm1489 = vweird.f32 %v1482
        %vm1490 = vmor %vm1488, %vm1489
        %v1491 = vsel %vm1490, %v1482, %v1487
        %v1492 = vrsqrt.pop %v1359
        %v1493 = vmul.f32 %v1492, %v1359
        %v1494 = vmul.f32 %v1493, %v1492
        %v1495 = vmul.f32 0.5, %v1494
        %v1496 = vsub.f32 1.5, %v1495
        %v1497 = vmul.f32 %v1492, %v1496
        %vm1498 = vweird.f32 %v1359
        %vm1499 = vweird.f32 %v1492
        %vm1500 = vmor %vm1498, %vm1499
        %v1501 = vsel %vm1500, %v1492, %v1497
        %v1502 = vrsqrt.pop %v1360
        %v1503 = vmul.f32 %v1502, %v1360
        %v1504 = vmul.f32 %v1503, %v1502
        %v1505 = vmul.f32 0.5, %v1504
        %v1506 = vsub.f32 1.5, %v1505
        %v1507 = vmul.f32 %v1502, %v1506
        %vm1508 = vweird.f32 %v1360
        %vm1509 = vweird.f32 %v1502
        %vm1510 = vmor %vm1508, %vm1509
        %v1511 = vsel %vm1510, %v1502, %v1507
        %v1512 = vrsqrt.pop %v1361
        %v1513 = vmul.f32 %v1512, %v1361
        %v1514 = vmul.f32 %v1513, %v1512
        %v1515 = vmul.f32 0.5, %v1514
        %v1516 = vsub.f32 1.5, %v1515
        %v1517 = vmul.f32 %v1512, %v1516
        %vm1518 = vweird.f32 %v1361
        %vm1519 = vweird.f32 %v1512
        %vm1520 = vmor %vm1518, %vm1519
        %v1521 = vsel %vm1520, %v1512, %v1517
        %v1522 = vmul.f32 %v1266, %v1371
        %v1523 = vmul.f32 %v1267, %v1381
        %v1524 = vmul.f32 %v1268, %v1391
        %v1525 = vmul.f32 %v1269, %v1401
        %v1526 = vmul.f32 %v1270, %v1411
        %v1527 = vmul.f32 %v1271, %v1421
        %v1528 = vmul.f32 %v1272, %v1431
        %v1529 = vmul.f32 %v1273, %v1441
        %v1530 = vmul.f32 %v1274, %v1451
        %v1531 = vmul.f32 %v1275, %v1461
        %v1532 = vmul.f32 %v1276, %v1471
        %v1533 = vmul.f32 %v1277, %v1481
        %v1534 = vmul.f32 %v1278, %v1491
        %v1535 = vmul.f32 %v1279, %v1501
        %v1536 = vmul.f32 %v1280, %v1511
        %v1537 = vmul.f32 %v1281, %v1521
        %v1538 = vpack.c.bf16 %v1523, %v1522
        %v1539 = vpack.c.bf16 %v1525, %v1524
        %v1540 = vpack.c.bf16 %v1527, %v1526
        %v1541 = vpack.c.bf16 %v1529, %v1528
        %v1542 = vpack.c.bf16 %v1531, %v1530
        %v1543 = vpack.c.bf16 %v1533, %v1532
        %v1544 = vpack.c.bf16 %v1535, %v1534
        %v1545 = vpack.c.bf16 %v1537, %v1536
        %v1547 = vsel %vm1074, %v1264, 0
        %v1550 = vsel %vm1074, %v1265, 0
        %v1553 = vsel %vm1074, %v1538, 0
        %v1556 = vsel %vm1074, %v1539, 0
        %v1559 = vsel %vm1074, %v1540, 0
        %v1562 = vsel %vm1074, %v1541, 0
        %v1565 = vsel %vm1074, %v1542, 0
        %v1568 = vsel %vm1074, %v1543, 0
        %v1571 = vsel %vm1074, %v1544, 0
        %v1574 = vsel %vm1074, %v1545, 0
        %1576 = vmatpush.bf16.xpose.msra.mxu0 %v1574
        %1577 = vmatpush.bf16.xpose.msra.mxu0 %v1571
        %1578 = vmatpush.bf16.xpose.msra.mxu0 %v1568
        %1579 = vmatpush.bf16.xpose.msra.mxu0 %v1565
        %1580 = vmatpush.bf16.xpose.msra.mxu0 %v1562
        %1581 = vmatpush.bf16.xpose.msra.mxu0 %v1559
        %1582 = vmatpush.bf16.xpose.msra.mxu0 %v1556
        %1583 = vmatpush.bf16.xpose.msra.mxu0 %v1553
        %1584 = vmatmul.bf16.gmra.mxu0 %v1547
        %v1585 = vpop.f32.mrf.mxu0
        %v1586 = vadd.f32 0.0, %v1585
        %v1587 = vpop.f32.mrf.mxu0
        %v1588 = vadd.f32 0.0, %v1587
        %1589 = vmatmul.bf16.gmra.mxu0 %v1550
        %v1590 = vpop.f32.mrf.mxu0
        %v1591 = vadd.f32 0.0, %v1590
        %v1592 = vpop.f32.mrf.mxu0
        %1593 = vdwg.mxu0
        %v1594 = vmul.f32 %v1586, 20.0
        %v1595 = vmul.f32 %v1588, 20.0
        %v1596 = vmul.f32 %v1591, 20.0
        %v1597 = vadd.f32 %v987, %v1594
        %v1598 = vadd.f32 %v989, %v1595
        %v1599 = vadd.f32 %v992, %v1596
        %1600 = vst [vmem:[%s663] sm:$0xff] %v1597
        %1601 = vst [vmem:[%s663 + $0x8] sm:$0xff] %v1598
        %1602 = vst [vmem:[%s663 + $0x10] sm:$0xff] %v1599
        %s1603 = sand.u32 %s460, 1
        %s1604 = scalar_lea.sflag [#allocation3], %s1603
        %s1605 = sand.u32 %s460, 1
        %s1606 = smul.addr %s1605, 24
        %s1607 = scalar_lea.vmem [#allocation2], %s1606
        %s1608 = sand.u32 %s486, 1
        %s1609 = scalar_lea.sflag [#allocation5], %s1608
        %s1610 = sand.u32 %s486, 1
        %s1611 = smul.addr %s1610, 24
        %s1612 = scalar_lea.vmem [#allocation4], %s1611
        // Predicated region
        $region97: #{tpu_custom_call.1} parent=95 // pred_check
          %p1613 = pneg %p470
        $region98: #{tpu_custom_call.1} parent=95 // pred_check_branch
          %1615 = sbr.rel (%p1613) target = $region100
        $region99: #{tpu_custom_call.1} parent=95 // pred_region
          %1617 = vsyncadd %s1604, 0
          %s1618 = smul.addr %s38, 3
          %s1619 = smul.addr %s1618, 8
          %s1620 = scalar_lea.hbm %s19, %s1619
          %s1621 = sshll.u32 %s1607, 4
          %s1622 = int_to_ptr.vmem [resolvable:$true] %s1621
          %s1623 = sshll.u32 %s1620, 4
          %s1624 = int_to_ptr.hbm [resolvable:$true] %s1623
          %1629 = dma.vmem_to_hbm [thread:$0]  %s1622, 384, %s1624, %s1604, 128, 128, 8
        $region100: #{tpu_custom_call.1} parent=95 // pred_fallthru
          _
        // Predicated region
        $region101: #{tpu_custom_call.1} parent=95 // pred_check
          %p1630 = pneg %p496
        $region102: #{tpu_custom_call.1} parent=95 // pred_check_branch
          %1632 = sbr.rel (%p1630) target = $region104
        $region103: #{tpu_custom_call.1} parent=95 // pred_region
          %1634 = vsyncadd %s1609, 0
          %s1635 = smul.addr %s38, 3
          %s1636 = smul.addr %s1635, 8
          %s1637 = scalar_lea.hbm %s20, %s1636
          %s1638 = sshll.u32 %s1612, 4
          %s1639 = int_to_ptr.vmem [resolvable:$true] %s1638
          %s1640 = sshll.u32 %s1637, 4
          %s1641 = int_to_ptr.hbm [resolvable:$true] %s1640
          %1646 = dma.vmem_to_hbm [thread:$0]  %s1639, 384, %s1641, %s1609, 128, 128, 8
        $region104: #{tpu_custom_call.1} parent=95 // pred_fallthru
          _
      $region96: #{tpu_custom_call.1} parent=5 // pred_fallthru
        _
      %p1647 = scmp.le.s32.totalorder 2, %s33
      // Predicated region
      $region105: #{tpu_custom_call.1} parent=5 // pred_check
        %p1648 = pneg %p1647
      $region106: #{tpu_custom_call.1} parent=5 // pred_check_branch
        %1650 = sbr.rel (%p1648) target = $region108
      $region107: #{tpu_custom_call.1} parent=5 // pred_region
        %s1651 = ssub.s32 %s33, 2
        // Predicated region
        $region109: #{tpu_custom_call.1} parent=107 // pred_check
          %p1652 = pneg %p476
        $region110: #{tpu_custom_call.1} parent=107 // pred_check_branch
          %1654 = sbr.rel (%p1652) target = $region112
        $region111: #{tpu_custom_call.1} parent=107 // pred_region
          %s1655 = sand.u32 %s461, 1
          %s1656 = scalar_lea.sflag [#allocation3], %s1655
          %s1657 = sand.u32 %s461, 1
          %s1658 = smul.addr %s1657, 24
          %s1659 = scalar_lea.vmem [#allocation2], %s1658
          %1661 = dma.done %s1656, 384
        $region112: #{tpu_custom_call.1} parent=107 // pred_fallthru
          _
        // Predicated region
        $region113: #{tpu_custom_call.1} parent=107 // pred_check
          %p1662 = pneg %p502
        $region114: #{tpu_custom_call.1} parent=107 // pred_check_branch
          %1664 = sbr.rel (%p1662) target = $region116
        $region115: #{tpu_custom_call.1} parent=107 // pred_region
          %s1665 = sand.u32 %s487, 1
          %s1666 = scalar_lea.sflag [#allocation5], %s1665
          %s1667 = sand.u32 %s487, 1
          %s1668 = smul.addr %s1667, 24
          %s1669 = scalar_lea.vmem [#allocation4], %s1668
          %1671 = dma.done %s1666, 384
        $region116: #{tpu_custom_call.1} parent=107 // pred_fallthru
          _
      $region108: #{tpu_custom_call.1} parent=5 // pred_fallthru
        _
    $region6: #{tpu_custom_call.1} parent=1 // loop_footer
      %s37 = sadd.s32 1, %s33
    $region7: #{tpu_custom_call.1} parent=1 // loop_footer_branch
      %32 = sbr.rel target = $region3
    $region8: #{tpu_custom_call.1} parent=1 // loop_exit
      _
    %1672 = vsyncpa [#allocation3], 1
    %s1673 = scalar_lea.sflag [#allocation3], 1
    %1674 = vsyncpa %s1673, 1
    %1675 = vsyncpa [#allocation5], 1
    %s1676 = scalar_lea.sflag [#allocation5], 1
    %1677 = vsyncpa %s1676, 1

</llo_original>
